<compile_context>
chip_gen: v5e
topology: v5e:2x2
jax: 0.10.0
libtpu: 0.0.40
codegen_flags: <defaults>
</compile_context>

<pallas_src>
import functools

import numpy as np
import jax
import jax.numpy as jnp
from jax import lax
from jax.experimental import pallas as pl
from jax.experimental.pallas import tpu as pltpu


def _srm_kernel(low_ref, high_ref, wfl_ref, wfh_ref, bf_ref,
                wtap_ref, mask_ref, b12_ref, watt_ref, o_ref,
                *, H, W, tap_offsets):
    """One grid step == one image. All 2-D values are (channels, H*W)."""
    HW = H * W
    Cout = watt_ref.shape[0]

    low = low_ref[...]           # (Cl, HW)
    high = high_ref[...]         # (Ch, HW)

    # ---- fusion: 1x1 conv over concat(low, high) + folded BN + ReLU --------
    xf = (jnp.dot(wfl_ref[...], low, preferred_element_type=jnp.float32)
          + jnp.dot(wfh_ref[...], high, preferred_element_type=jnp.float32)
          + bf_ref[...])
    xf = jnp.maximum(xf, 0.0)                                   # (Cout, HW)

    # ---- y = conv3x3_d1(xf) + conv3x3_d2(xf) + b1 + b2 ---------------------
    # Each spatial tap (dh, dw): lane-roll of the flattened image by dh*W+dw,
    # a precomputed boundary mask, and one channel matmul on the MXU.
    y = jnp.zeros((Cout, HW), jnp.float32)
    for t, (dh, dw) in enumerate(tap_offsets):
        if dh == 0 and dw == 0:
            shifted = xf
        else:
            s = dh * W + dw
            shifted = pltpu.roll(xf, shift=(-s) % HW, axis=1) * mask_ref[t]
        y = y + jnp.dot(wtap_ref[t], shifted, preferred_element_type=jnp.float32)
    y = y + b12_ref[...]

    # ---- channel attention: softmax_C(Watt @ GAP(y)); out = att * y --------
    # Watt @ mean_i(y) == mean_i(Watt @ y): keeps the matmul lane-dense.
    z = jnp.dot(watt_ref[...], y, preferred_element_type=jnp.float32)  # (Cout, HW)
    logits = jnp.sum(z, axis=1, keepdims=True) * (1.0 / HW)            # (Cout, 1)
    m = jnp.max(logits, axis=0, keepdims=True)
    e = jnp.exp(logits - m)
    att = e / jnp.sum(e, axis=0, keepdims=True)                        # (Cout, 1)

    o_ref[...] = (att * y).astype(o_ref.dtype)


def selective_refine_pallas(low_f, high_f, params, *, eps=1e-5):
    """low_f: (N, Cl, H, W); high_f: (N, Ch, H, W) -> (N, Cout, H, W)."""
    N, Cl, H, W = low_f.shape
    Ch = high_f.shape[1]
    Cout = params["conv1_w"].shape[0]
    HW = H * W

    # Fold fusion 1x1 conv + BatchNorm (eval) into an affine, split across the
    # low/high channel concat so no HBM concat is needed.
    wf = params["fusion_w"][:, :, 0, 0]                          # (Cout, Cl+Ch)
    scale = params["bn_gamma"] / jnp.sqrt(params["bn_var"] + eps)
    wf = wf * scale[:, None]
    bf = (params["bn_beta"] - params["bn_mean"] * scale).reshape(Cout, 1)
    wf_l, wf_h = wf[:, :Cl], wf[:, Cl:]

    # Merge conv1 (dil=1) and conv2 (dil=2) into one static tap list; the
    # shared (0,0) tap is summed -> 17 taps instead of 18.
    tap_w = {}
    for w_oihw, d in ((params["conv1_w"], 1), (params["conv2_w"], 2)):
        for kh in range(3):
            for kw in range(3):
                off = ((kh - 1) * d, (kw - 1) * d)
                w = w_oihw[:, :, kh, kw]                         # (Cout, Cout)
                tap_w[off] = w if off not in tap_w else tap_w[off] + w
    tap_offsets = tuple(tap_w.keys())
    T = len(tap_offsets)
    w_taps = jnp.stack([tap_w[o] for o in tap_offsets], axis=0)  # (T, Cout, Cout)
    b12 = (params["conv1_b"] + params["conv2_b"]).reshape(Cout, 1)

    # Compile-time boundary masks for the rolled taps (flat H*W layout).
    cols = np.arange(HW)
    hh, ww = cols // W, cols % W
    masks = np.stack(
        [((hh + dh >= 0) & (hh + dh < H) & (ww + dw >= 0) & (ww + dw < W))
         .astype(np.float32) for (dh, dw) in tap_offsets], axis=0)
    tap_masks = jnp.asarray(masks).reshape(T, 1, HW)

    watt = params["att_w"][:, :, 0, 0]                           # (Cout, Cout)

    # NCHW -> (N, C, H*W): free reshapes; spatial stays on the lane axis.
    low2 = low_f.reshape(N, Cl, HW)
    high2 = high_f.reshape(N, Ch, HW)

    kernel = functools.partial(_srm_kernel, H=H, W=W, tap_offsets=tap_offsets)

    out2 = pl.pallas_call(
        kernel,
        out_shape=jax.ShapeDtypeStruct((N, Cout, HW), low_f.dtype),
        grid_spec=pltpu.PrefetchScalarGridSpec(
            num_scalar_prefetch=0,
            grid=(N,),                                   # one image per step
            in_specs=[
                pl.BlockSpec((None, Cl, HW), lambda n: (n, 0, 0)),
                pl.BlockSpec((None, Ch, HW), lambda n: (n, 0, 0)),
                pl.BlockSpec((Cout, Cl), lambda n: (0, 0)),
                pl.BlockSpec((Cout, Ch), lambda n: (0, 0)),
                pl.BlockSpec((Cout, 1), lambda n: (0, 0)),
                pl.BlockSpec((T, Cout, Cout), lambda n: (0, 0, 0)),
                pl.BlockSpec((T, 1, HW), lambda n: (0, 0, 0)),
                pl.BlockSpec((Cout, 1), lambda n: (0, 0)),
                pl.BlockSpec((Cout, Cout), lambda n: (0, 0)),
            ],
            out_specs=pl.BlockSpec((None, Cout, HW), lambda n: (n, 0, 0)),
        ),
        # Per-step VMEM footprint here is tiny (<1 MiB); for realistic channel
        # counts, raise vmem_limit_bytes and keep double-buffered tiles well
        # under v7x's 64 MiB.
        compiler_params=pltpu.CompilerParams(
            dimension_semantics=("parallel",)),
    )(low2, high2, wf_l, wf_h, bf, w_taps, tap_masks, b12, watt)

    return out2.reshape(N, Cout, H, W)


def _reference(low_f, high_f, p, eps=1e-5):
    """Pure-JAX reference following the PyTorch module structure."""
    dn = ("NCHW", "OIHW", "NCHW")
    x = jnp.concatenate([low_f, high_f], axis=1)
    xf = lax.conv_general_dilated(x, p["fusion_w"], (1, 1), "VALID",
                                  dimension_numbers=dn)
    scale = p["bn_gamma"] / jnp.sqrt(p["bn_var"] + eps)
    shift = p["bn_beta"] - p["bn_mean"] * scale
    xf = jnp.maximum(xf * scale[None, :, None, None]
                     + shift[None, :, None, None], 0.0)

    def conv3x3(v, w, b, d):
        out = lax.conv_general_dilated(v, w, (1, 1), ((d, d), (d, d)),
                                       rhs_dilation=(d, d),
                                       dimension_numbers=dn)
        return out + b[None, :, None, None]

    x1 = conv3x3(xf, p["conv1_w"], p["conv1_b"], 1)
    x2 = conv3x3(xf, p["conv2_w"], p["conv2_b"], 2)
    y = x1 + x2
    gap = jnp.mean(y, axis=(2, 3), keepdims=True)                 # (N, C, 1, 1)
    logits = jnp.einsum("oc,nchw->nohw", p["att_w"][:, :, 0, 0], gap)
    att = jax.nn.softmax(logits, axis=1)
    return att * x1 + att * x2


if __name__ == "__main__":
    key = jax.random.PRNGKey(0)
    ks = jax.random.split(key, 12)

    N, Cl, Ch, Cout, H, W = 2, 4, 4, 8, 16, 16

    low_f = jax.random.normal(ks[0], (N, Cl, H, W), jnp.float32)
    high_f = jax.random.normal(ks[1], (N, Ch, H, W), jnp.float32)

    params = {
        "fusion_w": 0.2 * jax.random.normal(ks[2], (Cout, Cl + Ch, 1, 1), jnp.float32),
        "bn_gamma": 1.0 + 0.1 * jax.random.normal(ks[3], (Cout,), jnp.float32),
        "bn_beta": 0.1 * jax.random.normal(ks[4], (Cout,), jnp.float32),
        "bn_mean": 0.05 * jax.random.normal(ks[5], (Cout,), jnp.float32),
        "bn_var": 1.0 + jax.nn.softplus(jax.random.normal(ks[6], (Cout,), jnp.float32)),
        "conv1_w": 0.1 * jax.random.normal(ks[7], (Cout, Cout, 3, 3), jnp.float32),
        "conv1_b": 0.05 * jax.random.normal(ks[8], (Cout,), jnp.float32),
        "conv2_w": 0.1 * jax.random.normal(ks[9], (Cout, Cout, 3, 3), jnp.float32),
        "conv2_b": 0.05 * jax.random.normal(ks[10], (Cout,), jnp.float32),
        "att_w": 0.2 * jax.random.normal(ks[11], (Cout, Cout, 1, 1), jnp.float32),
    }

    out = selective_refine_pallas(low_f, high_f, params)
    out = jax.block_until_ready(out)

    ref = _reference(low_f, high_f, params)
    assert out.shape == (N, Cout, H, W)
    assert jnp.allclose(out, ref, atol=1e-4, rtol=1e-4), \
        float(jnp.max(jnp.abs(out - ref)))

    print("KERNEL_OK")
</pallas_src>

<mosaic_0001>
module attributes {stable_mosaic.version = 11 : i64} {
  func.func @_srm_kernel(%arg0: i32, %arg1: memref<1x4x256xf32, #tpu.memory_space<vmem>>, %arg2: memref<1x4x256xf32, #tpu.memory_space<vmem>>, %arg3: memref<8x4xf32, #tpu.memory_space<vmem>>, %arg4: memref<8x4xf32, #tpu.memory_space<vmem>>, %arg5: memref<8x1xf32, #tpu.memory_space<vmem>>, %arg6: memref<17x8x8xf32, #tpu.memory_space<vmem>>, %arg7: memref<17x1x256xf32, #tpu.memory_space<vmem>>, %arg8: memref<8x1xf32, #tpu.memory_space<vmem>>, %arg9: memref<8x8xf32, #tpu.memory_space<vmem>>, %arg10: memref<1x8x256xf32, #tpu.memory_space<vmem>>) attributes {dimension_semantics = [#tpu.dimension_semantics<parallel>], iteration_bounds = array<i64: 2>, scalar_prefetch = 0 : i64, scratch_operands = 0 : i64, tpu.core_type = #tpu.core_type<tc>, window_params = [{transform_indices = @transform_0, window_bounds = array<i64: 1, 4, 256>}, {transform_indices = @transform_1, window_bounds = array<i64: 1, 4, 256>}, {pipeline_mode = #tpu.pipeline_mode<synchronous>, transform_indices = @transform_2, window_bounds = array<i64: 8, 4>}, {pipeline_mode = #tpu.pipeline_mode<synchronous>, transform_indices = @transform_3, window_bounds = array<i64: 8, 4>}, {pipeline_mode = #tpu.pipeline_mode<synchronous>, transform_indices = @transform_4, window_bounds = array<i64: 8, 1>}, {pipeline_mode = #tpu.pipeline_mode<synchronous>, transform_indices = @transform_5, window_bounds = array<i64: 17, 8, 8>}, {pipeline_mode = #tpu.pipeline_mode<synchronous>, transform_indices = @transform_6, window_bounds = array<i64: 17, 1, 256>}, {pipeline_mode = #tpu.pipeline_mode<synchronous>, transform_indices = @transform_7, window_bounds = array<i64: 8, 1>}, {pipeline_mode = #tpu.pipeline_mode<synchronous>, transform_indices = @transform_8, window_bounds = array<i64: 8, 8>}, {transform_indices = @transform_9, window_bounds = array<i64: 1, 8, 256>}]} {
    %c0 = arith.constant 0 : index
    %c0_0 = arith.constant 0 : index
    %c0_1 = arith.constant 0 : index
    %0 = vector.load %arg1[%c0, %c0_0, %c0_1] : memref<1x4x256xf32, #tpu.memory_space<vmem>>, vector<1x4x256xf32>
    %1 = vector.shape_cast %0 : vector<1x4x256xf32> to vector<4x256xf32>
    %c0_2 = arith.constant 0 : index
    %c0_3 = arith.constant 0 : index
    %c0_4 = arith.constant 0 : index
    %2 = vector.load %arg2[%c0_2, %c0_3, %c0_4] : memref<1x4x256xf32, #tpu.memory_space<vmem>>, vector<1x4x256xf32>
    %3 = vector.shape_cast %2 : vector<1x4x256xf32> to vector<4x256xf32>
    %c0_5 = arith.constant 0 : index
    %c0_6 = arith.constant 0 : index
    %4 = vector.load %arg3[%c0_5, %c0_6] : memref<8x4xf32, #tpu.memory_space<vmem>>, vector<8x4xf32>
    %cst = arith.constant dense<0.000000e+00> : vector<8x256xf32>
    %5 = tpu.matmul %4, %1, %cst {dimension_numbers = #tpu.dot_dimension_numbers<[1], [0], [0], [1], [0, 0, 1, 1], [], []>} : vector<8x4xf32>, vector<4x256xf32>, vector<8x256xf32> -> vector<8x256xf32>
    %c0_7 = arith.constant 0 : index
    %c0_8 = arith.constant 0 : index
    %6 = vector.load %arg4[%c0_7, %c0_8] : memref<8x4xf32, #tpu.memory_space<vmem>>, vector<8x4xf32>
    %cst_9 = arith.constant dense<0.000000e+00> : vector<8x256xf32>
    %7 = tpu.matmul %6, %3, %cst_9 {dimension_numbers = #tpu.dot_dimension_numbers<[1], [0], [0], [1], [0, 0, 1, 1], [], []>} : vector<8x4xf32>, vector<4x256xf32>, vector<8x256xf32> -> vector<8x256xf32>
    %8 = arith.addf %5, %7 : vector<8x256xf32>
    %c0_10 = arith.constant 0 : index
    %c0_11 = arith.constant 0 : index
    %9 = vector.load %arg5[%c0_10, %c0_11] : memref<8x1xf32, #tpu.memory_space<vmem>>, vector<8x1xf32>
    %10 = vector.broadcast %9 : vector<8x1xf32> to vector<8x256xf32>
    %11 = arith.addf %8, %10 : vector<8x256xf32>
    %cst_12 = arith.constant 0.000000e+00 : f32
    %12 = vector.broadcast %cst_12 : f32 to vector<8x256xf32>
    %13 = arith.maximumf %11, %12 : vector<8x256xf32>
    %cst_13 = arith.constant 0.000000e+00 : f32
    %14 = vector.broadcast %cst_13 : f32 to vector<8x256xf32>
    %c17_i32 = arith.constant 17 : i32
    %15 = tpu.dynamic_rotate %13 by %c17_i32 dim 1 : vector<8x256xf32>, i32 -> vector<8x256xf32>
    %c0_14 = arith.constant 0 : index
    %c0_15 = arith.constant 0 : index
    %c0_16 = arith.constant 0 : index
    %16 = vector.load %arg7[%c0_14, %c0_15, %c0_16] : memref<17x1x256xf32, #tpu.memory_space<vmem>>, vector<1x1x256xf32>
    %17 = vector.shape_cast %16 : vector<1x1x256xf32> to vector<1x256xf32>
    %18 = vector.broadcast %17 : vector<1x256xf32> to vector<8x256xf32>
    %19 = arith.mulf %15, %18 : vector<8x256xf32>
    %c0_17 = arith.constant 0 : index
    %c0_18 = arith.constant 0 : index
    %c0_19 = arith.constant 0 : index
    %20 = vector.load %arg6[%c0_17, %c0_18, %c0_19] : memref<17x8x8xf32, #tpu.memory_space<vmem>>, vector<1x8x8xf32>
    %21 = vector.shape_cast %20 : vector<1x8x8xf32> to vector<8x8xf32>
    %cst_20 = arith.constant dense<0.000000e+00> : vector<8x256xf32>
    %22 = tpu.matmul %21, %19, %cst_20 {dimension_numbers = #tpu.dot_dimension_numbers<[1], [0], [0], [1], [0, 0, 1, 1], [], []>} : vector<8x8xf32>, vector<8x256xf32>, vector<8x256xf32> -> vector<8x256xf32>
    %23 = arith.addf %14, %22 : vector<8x256xf32>
    %c16_i32 = arith.constant 16 : i32
    %24 = tpu.dynamic_rotate %13 by %c16_i32 dim 1 : vector<8x256xf32>, i32 -> vector<8x256xf32>
    %c1 = arith.constant 1 : index
    %c0_21 = arith.constant 0 : index
    %c0_22 = arith.constant 0 : index
    %25 = vector.load %arg7[%c1, %c0_21, %c0_22] : memref<17x1x256xf32, #tpu.memory_space<vmem>>, vector<1x1x256xf32>
    %26 = vector.shape_cast %25 : vector<1x1x256xf32> to vector<1x256xf32>
    %27 = vector.broadcast %26 : vector<1x256xf32> to vector<8x256xf32>
    %28 = arith.mulf %24, %27 : vector<8x256xf32>
    %c1_23 = arith.constant 1 : index
    %c0_24 = arith.constant 0 : index
    %c0_25 = arith.constant 0 : index
    %29 = vector.load %arg6[%c1_23, %c0_24, %c0_25] : memref<17x8x8xf32, #tpu.memory_space<vmem>>, vector<1x8x8xf32>
    %30 = vector.shape_cast %29 : vector<1x8x8xf32> to vector<8x8xf32>
    %cst_26 = arith.constant dense<0.000000e+00> : vector<8x256xf32>
    %31 = tpu.matmul %30, %28, %cst_26 {dimension_numbers = #tpu.dot_dimension_numbers<[1], [0], [0], [1], [0, 0, 1, 1], [], []>} : vector<8x8xf32>, vector<8x256xf32>, vector<8x256xf32> -> vector<8x256xf32>
    %32 = arith.addf %23, %31 : vector<8x256xf32>
    %c15_i32 = arith.constant 15 : i32
    %33 = tpu.dynamic_rotate %13 by %c15_i32 dim 1 : vector<8x256xf32>, i32 -> vector<8x256xf32>
    %c2 = arith.constant 2 : index
    %c0_27 = arith.constant 0 : index
    %c0_28 = arith.constant 0 : index
    %34 = vector.load %arg7[%c2, %c0_27, %c0_28] : memref<17x1x256xf32, #tpu.memory_space<vmem>>, vector<1x1x256xf32>
    %35 = vector.shape_cast %34 : vector<1x1x256xf32> to vector<1x256xf32>
    %36 = vector.broadcast %35 : vector<1x256xf32> to vector<8x256xf32>
    %37 = arith.mulf %33, %36 : vector<8x256xf32>
    %c2_29 = arith.constant 2 : index
    %c0_30 = arith.constant 0 : index
    %c0_31 = arith.constant 0 : index
    %38 = vector.load %arg6[%c2_29, %c0_30, %c0_31] : memref<17x8x8xf32, #tpu.memory_space<vmem>>, vector<1x8x8xf32>
    %39 = vector.shape_cast %38 : vector<1x8x8xf32> to vector<8x8xf32>
    %cst_32 = arith.constant dense<0.000000e+00> : vector<8x256xf32>
    %40 = tpu.matmul %39, %37, %cst_32 {dimension_numbers = #tpu.dot_dimension_numbers<[1], [0], [0], [1], [0, 0, 1, 1], [], []>} : vector<8x8xf32>, vector<8x256xf32>, vector<8x256xf32> -> vector<8x256xf32>
    %41 = arith.addf %32, %40 : vector<8x256xf32>
    %c1_i32 = arith.constant 1 : i32
    %42 = tpu.dynamic_rotate %13 by %c1_i32 dim 1 : vector<8x256xf32>, i32 -> vector<8x256xf32>
    %c3 = arith.constant 3 : index
    %c0_33 = arith.constant 0 : index
    %c0_34 = arith.constant 0 : index
    %43 = vector.load %arg7[%c3, %c0_33, %c0_34] : memref<17x1x256xf32, #tpu.memory_space<vmem>>, vector<1x1x256xf32>
    %44 = vector.shape_cast %43 : vector<1x1x256xf32> to vector<1x256xf32>
    %45 = vector.broadcast %44 : vector<1x256xf32> to vector<8x256xf32>
    %46 = arith.mulf %42, %45 : vector<8x256xf32>
    %c3_35 = arith.constant 3 : index
    %c0_36 = arith.constant 0 : index
    %c0_37 = arith.constant 0 : index
    %47 = vector.load %arg6[%c3_35, %c0_36, %c0_37] : memref<17x8x8xf32, #tpu.memory_space<vmem>>, vector<1x8x8xf32>
    %48 = vector.shape_cast %47 : vector<1x8x8xf32> to vector<8x8xf32>
    %cst_38 = arith.constant dense<0.000000e+00> : vector<8x256xf32>
    %49 = tpu.matmul %48, %46, %cst_38 {dimension_numbers = #tpu.dot_dimension_numbers<[1], [0], [0], [1], [0, 0, 1, 1], [], []>} : vector<8x8xf32>, vector<8x256xf32>, vector<8x256xf32> -> vector<8x256xf32>
    %50 = arith.addf %41, %49 : vector<8x256xf32>
    %c4 = arith.constant 4 : index
    %c0_39 = arith.constant 0 : index
    %c0_40 = arith.constant 0 : index
    %51 = vector.load %arg6[%c4, %c0_39, %c0_40] : memref<17x8x8xf32, #tpu.memory_space<vmem>>, vector<1x8x8xf32>
    %52 = vector.shape_cast %51 : vector<1x8x8xf32> to vector<8x8xf32>
    %cst_41 = arith.constant dense<0.000000e+00> : vector<8x256xf32>
    %53 = tpu.matmul %52, %13, %cst_41 {dimension_numbers = #tpu.dot_dimension_numbers<[1], [0], [0], [1], [0, 0, 1, 1], [], []>} : vector<8x8xf32>, vector<8x256xf32>, vector<8x256xf32> -> vector<8x256xf32>
    %54 = arith.addf %50, %53 : vector<8x256xf32>
    %c255_i32 = arith.constant 255 : i32
    %55 = tpu.dynamic_rotate %13 by %c255_i32 dim 1 : vector<8x256xf32>, i32 -> vector<8x256xf32>
    %c5 = arith.constant 5 : index
    %c0_42 = arith.constant 0 : index
    %c0_43 = arith.constant 0 : index
    %56 = vector.load %arg7[%c5, %c0_42, %c0_43] : memref<17x1x256xf32, #tpu.memory_space<vmem>>, vector<1x1x256xf32>
    %57 = vector.shape_cast %56 : vector<1x1x256xf32> to vector<1x256xf32>
    %58 = vector.broadcast %57 : vector<1x256xf32> to vector<8x256xf32>
    %59 = arith.mulf %55, %58 : vector<8x256xf32>
    %c5_44 = arith.constant 5 : index
    %c0_45 = arith.constant 0 : index
    %c0_46 = arith.constant 0 : index
    %60 = vector.load %arg6[%c5_44, %c0_45, %c0_46] : memref<17x8x8xf32, #tpu.memory_space<vmem>>, vector<1x8x8xf32>
    %61 = vector.shape_cast %60 : vector<1x8x8xf32> to vector<8x8xf32>
    %cst_47 = arith.constant dense<0.000000e+00> : vector<8x256xf32>
    %62 = tpu.matmul %61, %59, %cst_47 {dimension_numbers = #tpu.dot_dimension_numbers<[1], [0], [0], [1], [0, 0, 1, 1], [], []>} : vector<8x8xf32>, vector<8x256xf32>, vector<8x256xf32> -> vector<8x256xf32>
    %63 = arith.addf %54, %62 : vector<8x256xf32>
    %c241_i32 = arith.constant 241 : i32
    %64 = tpu.dynamic_rotate %13 by %c241_i32 dim 1 : vector<8x256xf32>, i32 -> vector<8x256xf32>
    %c6 = arith.constant 6 : index
    %c0_48 = arith.constant 0 : index
    %c0_49 = arith.constant 0 : index
    %65 = vector.load %arg7[%c6, %c0_48, %c0_49] : memref<17x1x256xf32, #tpu.memory_space<vmem>>, vector<1x1x256xf32>
    %66 = vector.shape_cast %65 : vector<1x1x256xf32> to vector<1x256xf32>
    %67 = vector.broadcast %66 : vector<1x256xf32> to vector<8x256xf32>
    %68 = arith.mulf %64, %67 : vector<8x256xf32>
    %c6_50 = arith.constant 6 : index
    %c0_51 = arith.constant 0 : index
    %c0_52 = arith.constant 0 : index
    %69 = vector.load %arg6[%c6_50, %c0_51, %c0_52] : memref<17x8x8xf32, #tpu.memory_space<vmem>>, vector<1x8x8xf32>
    %70 = vector.shape_cast %69 : vector<1x8x8xf32> to vector<8x8xf32>
    %cst_53 = arith.constant dense<0.000000e+00> : vector<8x256xf32>
    %71 = tpu.matmul %70, %68, %cst_53 {dimension_numbers = #tpu.dot_dimension_numbers<[1], [0], [0], [1], [0, 0, 1, 1], [], []>} : vector<8x8xf32>, vector<8x256xf32>, vector<8x256xf32> -> vector<8x256xf32>
    %72 = arith.addf %63, %71 : vector<8x256xf32>
    %c240_i32 = arith.constant 240 : i32
    %73 = tpu.dynamic_rotate %13 by %c240_i32 dim 1 : vector<8x256xf32>, i32 -> vector<8x256xf32>
    %c7 = arith.constant 7 : index
    %c0_54 = arith.constant 0 : index
    %c0_55 = arith.constant 0 : index
    %74 = vector.load %arg7[%c7, %c0_54, %c0_55] : memref<17x1x256xf32, #tpu.memory_space<vmem>>, vector<1x1x256xf32>
    %75 = vector.shape_cast %74 : vector<1x1x256xf32> to vector<1x256xf32>
    %76 = vector.broadcast %75 : vector<1x256xf32> to vector<8x256xf32>
    %77 = arith.mulf %73, %76 : vector<8x256xf32>
    %c7_56 = arith.constant 7 : index
    %c0_57 = arith.constant 0 : index
    %c0_58 = arith.constant 0 : index
    %78 = vector.load %arg6[%c7_56, %c0_57, %c0_58] : memref<17x8x8xf32, #tpu.memory_space<vmem>>, vector<1x8x8xf32>
    %79 = vector.shape_cast %78 : vector<1x8x8xf32> to vector<8x8xf32>
    %cst_59 = arith.constant dense<0.000000e+00> : vector<8x256xf32>
    %80 = tpu.matmul %79, %77, %cst_59 {dimension_numbers = #tpu.dot_dimension_numbers<[1], [0], [0], [1], [0, 0, 1, 1], [], []>} : vector<8x8xf32>, vector<8x256xf32>, vector<8x256xf32> -> vector<8x256xf32>
    %81 = arith.addf %72, %80 : vector<8x256xf32>
    %c239_i32 = arith.constant 239 : i32
    %82 = tpu.dynamic_rotate %13 by %c239_i32 dim 1 : vector<8x256xf32>, i32 -> vector<8x256xf32>
    %c8 = arith.constant 8 : index
    %c0_60 = arith.constant 0 : index
    %c0_61 = arith.constant 0 : index
    %83 = vector.load %arg7[%c8, %c0_60, %c0_61] : memref<17x1x256xf32, #tpu.memory_space<vmem>>, vector<1x1x256xf32>
    %84 = vector.shape_cast %83 : vector<1x1x256xf32> to vector<1x256xf32>
    %85 = vector.broadcast %84 : vector<1x256xf32> to vector<8x256xf32>
    %86 = arith.mulf %82, %85 : vector<8x256xf32>
    %c8_62 = arith.constant 8 : index
    %c0_63 = arith.constant 0 : index
    %c0_64 = arith.constant 0 : index
    %87 = vector.load %arg6[%c8_62, %c0_63, %c0_64] : memref<17x8x8xf32, #tpu.memory_space<vmem>>, vector<1x8x8xf32>
    %88 = vector.shape_cast %87 : vector<1x8x8xf32> to vector<8x8xf32>
    %cst_65 = arith.constant dense<0.000000e+00> : vector<8x256xf32>
    %89 = tpu.matmul %88, %86, %cst_65 {dimension_numbers = #tpu.dot_dimension_numbers<[1], [0], [0], [1], [0, 0, 1, 1], [], []>} : vector<8x8xf32>, vector<8x256xf32>, vector<8x256xf32> -> vector<8x256xf32>
    %90 = arith.addf %81, %89 : vector<8x256xf32>
    %c34_i32 = arith.constant 34 : i32
    %91 = tpu.dynamic_rotate %13 by %c34_i32 dim 1 : vector<8x256xf32>, i32 -> vector<8x256xf32>
    %c9 = arith.constant 9 : index
    %c0_66 = arith.constant 0 : index
    %c0_67 = arith.constant 0 : index
    %92 = vector.load %arg7[%c9, %c0_66, %c0_67] : memref<17x1x256xf32, #tpu.memory_space<vmem>>, vector<1x1x256xf32>
    %93 = vector.shape_cast %92 : vector<1x1x256xf32> to vector<1x256xf32>
    %94 = vector.broadcast %93 : vector<1x256xf32> to vector<8x256xf32>
    %95 = arith.mulf %91, %94 : vector<8x256xf32>
    %c9_68 = arith.constant 9 : index
    %c0_69 = arith.constant 0 : index
    %c0_70 = arith.constant 0 : index
    %96 = vector.load %arg6[%c9_68, %c0_69, %c0_70] : memref<17x8x8xf32, #tpu.memory_space<vmem>>, vector<1x8x8xf32>
    %97 = vector.shape_cast %96 : vector<1x8x8xf32> to vector<8x8xf32>
    %cst_71 = arith.constant dense<0.000000e+00> : vector<8x256xf32>
    %98 = tpu.matmul %97, %95, %cst_71 {dimension_numbers = #tpu.dot_dimension_numbers<[1], [0], [0], [1], [0, 0, 1, 1], [], []>} : vector<8x8xf32>, vector<8x256xf32>, vector<8x256xf32> -> vector<8x256xf32>
    %99 = arith.addf %90, %98 : vector<8x256xf32>
    %c32_i32 = arith.constant 32 : i32
    %100 = tpu.dynamic_rotate %13 by %c32_i32 dim 1 : vector<8x256xf32>, i32 -> vector<8x256xf32>
    %c10 = arith.constant 10 : index
    %c0_72 = arith.constant 0 : index
    %c0_73 = arith.constant 0 : index
    %101 = vector.load %arg7[%c10, %c0_72, %c0_73] : memref<17x1x256xf32, #tpu.memory_space<vmem>>, vector<1x1x256xf32>
    %102 = vector.shape_cast %101 : vector<1x1x256xf32> to vector<1x256xf32>
    %103 = vector.broadcast %102 : vector<1x256xf32> to vector<8x256xf32>
    %104 = arith.mulf %100, %103 : vector<8x256xf32>
    %c10_74 = arith.constant 10 : index
    %c0_75 = arith.constant 0 : index
    %c0_76 = arith.constant 0 : index
    %105 = vector.load %arg6[%c10_74, %c0_75, %c0_76] : memref<17x8x8xf32, #tpu.memory_space<vmem>>, vector<1x8x8xf32>
    %106 = vector.shape_cast %105 : vector<1x8x8xf32> to vector<8x8xf32>
    %cst_77 = arith.constant dense<0.000000e+00> : vector<8x256xf32>
    %107 = tpu.matmul %106, %104, %cst_77 {dimension_numbers = #tpu.dot_dimension_numbers<[1], [0], [0], [1], [0, 0, 1, 1], [], []>} : vector<8x8xf32>, vector<8x256xf32>, vector<8x256xf32> -> vector<8x256xf32>
    %108 = arith.addf %99, %107 : vector<8x256xf32>
    %c30_i32 = arith.constant 30 : i32
    %109 = tpu.dynamic_rotate %13 by %c30_i32 dim 1 : vector<8x256xf32>, i32 -> vector<8x256xf32>
    %c11 = arith.constant 11 : index
    %c0_78 = arith.constant 0 : index
    %c0_79 = arith.constant 0 : index
    %110 = vector.load %arg7[%c11, %c0_78, %c0_79] : memref<17x1x256xf32, #tpu.memory_space<vmem>>, vector<1x1x256xf32>
    %111 = vector.shape_cast %110 : vector<1x1x256xf32> to vector<1x256xf32>
    %112 = vector.broadcast %111 : vector<1x256xf32> to vector<8x256xf32>
    %113 = arith.mulf %109, %112 : vector<8x256xf32>
    %c11_80 = arith.constant 11 : index
    %c0_81 = arith.constant 0 : index
    %c0_82 = arith.constant 0 : index
    %114 = vector.load %arg6[%c11_80, %c0_81, %c0_82] : memref<17x8x8xf32, #tpu.memory_space<vmem>>, vector<1x8x8xf32>
    %115 = vector.shape_cast %114 : vector<1x8x8xf32> to vector<8x8xf32>
    %cst_83 = arith.constant dense<0.000000e+00> : vector<8x256xf32>
    %116 = tpu.matmul %115, %113, %cst_83 {dimension_numbers = #tpu.dot_dimension_numbers<[1], [0], [0], [1], [0, 0, 1, 1], [], []>} : vector<8x8xf32>, vector<8x256xf32>, vector<8x256xf32> -> vector<8x256xf32>
    %117 = arith.addf %108, %116 : vector<8x256xf32>
    %c2_i32 = arith.constant 2 : i32
    %118 = tpu.dynamic_rotate %13 by %c2_i32 dim 1 : vector<8x256xf32>, i32 -> vector<8x256xf32>
    %c12 = arith.constant 12 : index
    %c0_84 = arith.constant 0 : index
    %c0_85 = arith.constant 0 : index
    %119 = vector.load %arg7[%c12, %c0_84, %c0_85] : memref<17x1x256xf32, #tpu.memory_space<vmem>>, vector<1x1x256xf32>
    %120 = vector.shape_cast %119 : vector<1x1x256xf32> to vector<1x256xf32>
    %121 = vector.broadcast %120 : vector<1x256xf32> to vector<8x256xf32>
    %122 = arith.mulf %118, %121 : vector<8x256xf32>
    %c12_86 = arith.constant 12 : index
    %c0_87 = arith.constant 0 : index
    %c0_88 = arith.constant 0 : index
    %123 = vector.load %arg6[%c12_86, %c0_87, %c0_88] : memref<17x8x8xf32, #tpu.memory_space<vmem>>, vector<1x8x8xf32>
    %124 = vector.shape_cast %123 : vector<1x8x8xf32> to vector<8x8xf32>
    %cst_89 = arith.constant dense<0.000000e+00> : vector<8x256xf32>
    %125 = tpu.matmul %124, %122, %cst_89 {dimension_numbers = #tpu.dot_dimension_numbers<[1], [0], [0], [1], [0, 0, 1, 1], [], []>} : vector<8x8xf32>, vector<8x256xf32>, vector<8x256xf32> -> vector<8x256xf32>
    %126 = arith.addf %117, %125 : vector<8x256xf32>
    %c254_i32 = arith.constant 254 : i32
    %127 = tpu.dynamic_rotate %13 by %c254_i32 dim 1 : vector<8x256xf32>, i32 -> vector<8x256xf32>
    %c13 = arith.constant 13 : index
    %c0_90 = arith.constant 0 : index
    %c0_91 = arith.constant 0 : index
    %128 = vector.load %arg7[%c13, %c0_90, %c0_91] : memref<17x1x256xf32, #tpu.memory_space<vmem>>, vector<1x1x256xf32>
    %129 = vector.shape_cast %128 : vector<1x1x256xf32> to vector<1x256xf32>
    %130 = vector.broadcast %129 : vector<1x256xf32> to vector<8x256xf32>
    %131 = arith.mulf %127, %130 : vector<8x256xf32>
    %c13_92 = arith.constant 13 : index
    %c0_93 = arith.constant 0 : index
    %c0_94 = arith.constant 0 : index
    %132 = vector.load %arg6[%c13_92, %c0_93, %c0_94] : memref<17x8x8xf32, #tpu.memory_space<vmem>>, vector<1x8x8xf32>
    %133 = vector.shape_cast %132 : vector<1x8x8xf32> to vector<8x8xf32>
    %cst_95 = arith.constant dense<0.000000e+00> : vector<8x256xf32>
    %134 = tpu.matmul %133, %131, %cst_95 {dimension_numbers = #tpu.dot_dimension_numbers<[1], [0], [0], [1], [0, 0, 1, 1], [], []>} : vector<8x8xf32>, vector<8x256xf32>, vector<8x256xf32> -> vector<8x256xf32>
    %135 = arith.addf %126, %134 : vector<8x256xf32>
    %c226_i32 = arith.constant 226 : i32
    %136 = tpu.dynamic_rotate %13 by %c226_i32 dim 1 : vector<8x256xf32>, i32 -> vector<8x256xf32>
    %c14 = arith.constant 14 : index
    %c0_96 = arith.constant 0 : index
    %c0_97 = arith.constant 0 : index
    %137 = vector.load %arg7[%c14, %c0_96, %c0_97] : memref<17x1x256xf32, #tpu.memory_space<vmem>>, vector<1x1x256xf32>
    %138 = vector.shape_cast %137 : vector<1x1x256xf32> to vector<1x256xf32>
    %139 = vector.broadcast %138 : vector<1x256xf32> to vector<8x256xf32>
    %140 = arith.mulf %136, %139 : vector<8x256xf32>
    %c14_98 = arith.constant 14 : index
    %c0_99 = arith.constant 0 : index
    %c0_100 = arith.constant 0 : index
    %141 = vector.load %arg6[%c14_98, %c0_99, %c0_100] : memref<17x8x8xf32, #tpu.memory_space<vmem>>, vector<1x8x8xf32>
    %142 = vector.shape_cast %141 : vector<1x8x8xf32> to vector<8x8xf32>
    %cst_101 = arith.constant dense<0.000000e+00> : vector<8x256xf32>
    %143 = tpu.matmul %142, %140, %cst_101 {dimension_numbers = #tpu.dot_dimension_numbers<[1], [0], [0], [1], [0, 0, 1, 1], [], []>} : vector<8x8xf32>, vector<8x256xf32>, vector<8x256xf32> -> vector<8x256xf32>
    %144 = arith.addf %135, %143 : vector<8x256xf32>
    %c224_i32 = arith.constant 224 : i32
    %145 = tpu.dynamic_rotate %13 by %c224_i32 dim 1 : vector<8x256xf32>, i32 -> vector<8x256xf32>
    %c15 = arith.constant 15 : index
    %c0_102 = arith.constant 0 : index
    %c0_103 = arith.constant 0 : index
    %146 = vector.load %arg7[%c15, %c0_102, %c0_103] : memref<17x1x256xf32, #tpu.memory_space<vmem>>, vector<1x1x256xf32>
    %147 = vector.shape_cast %146 : vector<1x1x256xf32> to vector<1x256xf32>
    %148 = vector.broadcast %147 : vector<1x256xf32> to vector<8x256xf32>
    %149 = arith.mulf %145, %148 : vector<8x256xf32>
    %c15_104 = arith.constant 15 : index
    %c0_105 = arith.constant 0 : index
    %c0_106 = arith.constant 0 : index
    %150 = vector.load %arg6[%c15_104, %c0_105, %c0_106] : memref<17x8x8xf32, #tpu.memory_space<vmem>>, vector<1x8x8xf32>
    %151 = vector.shape_cast %150 : vector<1x8x8xf32> to vector<8x8xf32>
    %cst_107 = arith.constant dense<0.000000e+00> : vector<8x256xf32>
    %152 = tpu.matmul %151, %149, %cst_107 {dimension_numbers = #tpu.dot_dimension_numbers<[1], [0], [0], [1], [0, 0, 1, 1], [], []>} : vector<8x8xf32>, vector<8x256xf32>, vector<8x256xf32> -> vector<8x256xf32>
    %153 = arith.addf %144, %152 : vector<8x256xf32>
    %c222_i32 = arith.constant 222 : i32
    %154 = tpu.dynamic_rotate %13 by %c222_i32 dim 1 : vector<8x256xf32>, i32 -> vector<8x256xf32>
    %c16 = arith.constant 16 : index
    %c0_108 = arith.constant 0 : index
    %c0_109 = arith.constant 0 : index
    %155 = vector.load %arg7[%c16, %c0_108, %c0_109] : memref<17x1x256xf32, #tpu.memory_space<vmem>>, vector<1x1x256xf32>
    %156 = vector.shape_cast %155 : vector<1x1x256xf32> to vector<1x256xf32>
    %157 = vector.broadcast %156 : vector<1x256xf32> to vector<8x256xf32>
    %158 = arith.mulf %154, %157 : vector<8x256xf32>
    %c16_110 = arith.constant 16 : index
    %c0_111 = arith.constant 0 : index
    %c0_112 = arith.constant 0 : index
    %159 = vector.load %arg6[%c16_110, %c0_111, %c0_112] : memref<17x8x8xf32, #tpu.memory_space<vmem>>, vector<1x8x8xf32>
    %160 = vector.shape_cast %159 : vector<1x8x8xf32> to vector<8x8xf32>
    %cst_113 = arith.constant dense<0.000000e+00> : vector<8x256xf32>
    %161 = tpu.matmul %160, %158, %cst_113 {dimension_numbers = #tpu.dot_dimension_numbers<[1], [0], [0], [1], [0, 0, 1, 1], [], []>} : vector<8x8xf32>, vector<8x256xf32>, vector<8x256xf32> -> vector<8x256xf32>
    %162 = arith.addf %153, %161 : vector<8x256xf32>
    %c0_114 = arith.constant 0 : index
    %c0_115 = arith.constant 0 : index
    %163 = vector.load %arg8[%c0_114, %c0_115] : memref<8x1xf32, #tpu.memory_space<vmem>>, vector<8x1xf32>
    %164 = vector.broadcast %163 : vector<8x1xf32> to vector<8x256xf32>
    %165 = arith.addf %162, %164 : vector<8x256xf32>
    %c0_116 = arith.constant 0 : index
    %c0_117 = arith.constant 0 : index
    %166 = vector.load %arg9[%c0_116, %c0_117] : memref<8x8xf32, #tpu.memory_space<vmem>>, vector<8x8xf32>
    %cst_118 = arith.constant dense<0.000000e+00> : vector<8x256xf32>
    %167 = tpu.matmul %166, %165, %cst_118 {dimension_numbers = #tpu.dot_dimension_numbers<[1], [0], [0], [1], [0, 0, 1, 1], [], []>} : vector<8x8xf32>, vector<8x256xf32>, vector<8x256xf32> -> vector<8x256xf32>
    %cst_119 = arith.constant dense<0.000000e+00> : vector<8xf32>
    %168 = vector.multi_reduction <add>, %167, %cst_119 [1] : vector<8x256xf32> to vector<8xf32>
    %169 = vector.shape_cast %168 : vector<8xf32> to vector<8x1xf32>
    %cst_120 = arith.constant 3.906250e-03 : f32
    %170 = vector.broadcast %cst_120 : f32 to vector<8x1xf32>
    %171 = arith.mulf %169, %170 : vector<8x1xf32>
    %cst_121 = arith.constant dense<0xFF800000> : vector<1xf32>
    %172 = vector.multi_reduction <maximumf>, %171, %cst_121 [0] : vector<8x1xf32> to vector<1xf32>
    %173 = vector.shape_cast %172 : vector<1xf32> to vector<1x1xf32>
    %174 = vector.broadcast %173 : vector<1x1xf32> to vector<8x1xf32>
    %175 = arith.subf %171, %174 : vector<8x1xf32>
    %176 = math.exp %175 : vector<8x1xf32>
    %cst_122 = arith.constant dense<0.000000e+00> : vector<1xf32>
    %177 = vector.multi_reduction <add>, %176, %cst_122 [0] : vector<8x1xf32> to vector<1xf32>
    %178 = vector.shape_cast %177 : vector<1xf32> to vector<1x1xf32>
    %179 = vector.broadcast %178 : vector<1x1xf32> to vector<8x1xf32>
    %180 = arith.divf %176, %179 : vector<8x1xf32>
    %181 = vector.broadcast %180 : vector<8x1xf32> to vector<8x256xf32>
    %182 = arith.mulf %181, %165 : vector<8x256xf32>
    %c0_123 = arith.constant 0 : index
    %c0_124 = arith.constant 0 : index
    %c0_125 = arith.constant 0 : index
    %183 = vector.load %arg10[%c0_123, %c0_124, %c0_125] : memref<1x8x256xf32, #tpu.memory_space<vmem>>, vector<1x8x256xf32>
    %184 = vector.shape_cast %183 : vector<1x8x256xf32> to vector<8x256xf32>
    %185 = vector.shape_cast %182 : vector<8x256xf32> to vector<1x8x256xf32>
    tpu.vector_store %arg10[%c0_123, %c0_124, %c0_125], %185 {strides = array<i32>} : memref<1x8x256xf32, #tpu.memory_space<vmem>>, vector<1x8x256xf32>,
    return
  }
  func.func @transform_0(%arg0: i32) -> (i32, i32, i32) {
    %c0_i32 = arith.constant 0 : i32
    %c0_i32_0 = arith.constant 0 : i32
    %c0_i32_1 = arith.constant 0 : i32
    return %arg0, %c0_i32, %c0_i32_0 : i32, i32, i32
  }
  func.func @transform_1(%arg0: i32) -> (i32, i32, i32) {
    %c0_i32 = arith.constant 0 : i32
    %c0_i32_0 = arith.constant 0 : i32
    %c0_i32_1 = arith.constant 0 : i32
    return %arg0, %c0_i32, %c0_i32_0 : i32, i32, i32
  }
  func.func @transform_2(%arg0: i32) -> (i32, i32) {
    %c0_i32 = arith.constant 0 : i32
    %c0_i32_0 = arith.constant 0 : i32
    %c0_i32_1 = arith.constant 0 : i32
    return %c0_i32, %c0_i32_0 : i32, i32
  }
  func.func @transform_3(%arg0: i32) -> (i32, i32) {
    %c0_i32 = arith.constant 0 : i32
    %c0_i32_0 = arith.constant 0 : i32
    %c0_i32_1 = arith.constant 0 : i32
    return %c0_i32, %c0_i32_0 : i32, i32
  }
  func.func @transform_4(%arg0: i32) -> (i32, i32) {
    %c0_i32 = arith.constant 0 : i32
    %c0_i32_0 = arith.constant 0 : i32
    %c0_i32_1 = arith.constant 0 : i32
    return %c0_i32, %c0_i32_0 : i32, i32
  }
  func.func @transform_5(%arg0: i32) -> (i32, i32, i32) {
    %c0_i32 = arith.constant 0 : i32
    %c0_i32_0 = arith.constant 0 : i32
    %c0_i32_1 = arith.constant 0 : i32
    %c0_i32_2 = arith.constant 0 : i32
    return %c0_i32, %c0_i32_0, %c0_i32_1 : i32, i32, i32
  }
  func.func @transform_6(%arg0: i32) -> (i32, i32, i32) {
    %c0_i32 = arith.constant 0 : i32
    %c0_i32_0 = arith.constant 0 : i32
    %c0_i32_1 = arith.constant 0 : i32
    %c0_i32_2 = arith.constant 0 : i32
    return %c0_i32, %c0_i32_0, %c0_i32_1 : i32, i32, i32
  }
  func.func @transform_7(%arg0: i32) -> (i32, i32) {
    %c0_i32 = arith.constant 0 : i32
    %c0_i32_0 = arith.constant 0 : i32
    %c0_i32_1 = arith.constant 0 : i32
    return %c0_i32, %c0_i32_0 : i32, i32
  }
  func.func @transform_8(%arg0: i32) -> (i32, i32) {
    %c0_i32 = arith.constant 0 : i32
    %c0_i32_0 = arith.constant 0 : i32
    %c0_i32_1 = arith.constant 0 : i32
    return %c0_i32, %c0_i32_0 : i32, i32
  }
  func.func @transform_9(%arg0: i32) -> (i32, i32, i32) {
    %c0_i32 = arith.constant 0 : i32
    %c0_i32_0 = arith.constant 0 : i32
    %c0_i32_1 = arith.constant 0 : i32
    return %arg0, %c0_i32, %c0_i32_0 : i32, i32, i32
  }
}

</mosaic_0001>

<llo_original>
// kernel: tpu_custom_call.1
$region0: #{tpu_custom_call.1}
  #allocation0 [shape = 'u32[]', space=smem, size = 0x4, offset = 0x4, fixed_abs, tag = 'smem constant byte address 0x4 - core index']
  #allocation1 [shape = 'u32[72,128]{1,0:T(1,128)}', space=vmem, size = 0x9000, scoped, tag = 'internal scratch']
  %s0 = inlined_call_operand.vmem [shape: f32[2,4,256], index: 0, kind: input, shape index: {}]
  %s1 = inlined_call_operand.vmem [shape: f32[2,4,256], index: 1, kind: input, shape index: {}]
  %s2 = inlined_call_operand.vmem [shape: f32[8,4], index: 2, kind: input, shape index: {}]
  %s3 = inlined_call_operand.vmem [shape: f32[8,4], index: 3, kind: input, shape index: {}]
  %s4 = inlined_call_operand.vmem [shape: f32[8,1], index: 4, kind: input, shape index: {}]
  %s5 = inlined_call_operand.vmem [shape: f32[17,8,8], index: 5, kind: input, shape index: {}]
  %s6 = inlined_call_operand.vmem [shape: f32[17,1,256], index: 6, kind: input, shape index: {}]
  %s7 = inlined_call_operand.vmem [shape: f32[8,1], index: 7, kind: input, shape index: {}]
  %s8 = inlined_call_operand.vmem [shape: f32[8,8], index: 8, kind: input, shape index: {}]
  %s9 = inlined_call_operand.hbm [shape: f32[2,8,256], index: 9, kind: output, shape index: {}]
  %s10 = sld [smem:[#allocation0]]
  $region69: #{tpu_custom_call.1} parent=0
    _
  %s12 = ssub.s32 1, %s10
  %s13 = scalar_select 0, %s12, %s10
  $region1: #{tpu_custom_call.1} parent=0
    #allocation2 [shape = 'u8[16384]{0}', space=vmem, size = 0x4000, scoped, tag = 'output window, operand 0']
    #allocation3 [shape = 's32[2]{0}', space=sflag, size = 0x8, scoped, tag = 'scoped memory for tpu_custom_call.1']
    %14 = vsyncpa [#allocation3], 0
    %s15 = scalar_lea.sflag [#allocation3], 1
    %16 = vsyncpa %s15, 0
    loop: start=0, step=1, limit=4
    $region2: #{tpu_custom_call.1} parent=1 // loop_pre_header
      _
    $region3: #{tpu_custom_call.1} parent=1 // loop_header
      %s18 = sphi 0, %s22
      %p19 = scmp.ge.s32.totalorder %s18, 4
      %s28 = sphi 0, %s30
      %s31 = sphi 0, %s28
      %s32 = sphi 0, %s31
      %s48 = sphi 0, %s32
      %s54 = sphi 0, %s56
      %s57 = sphi 0, %s54
      %s58 = sphi 0, %s57
      %s74 = sphi 0, %s58
      %s78 = sphi 0, %s78
      %s80 = sphi 0, %s78
      %s81 = sphi 0, %s80
      %s95 = sphi 0, %s81
      %s99 = sphi 0, %s99
      %s101 = sphi 0, %s99
      %s102 = sphi 0, %s101
      %s116 = sphi 0, %s102
      %s120 = sphi 0, %s120
      %s122 = sphi 0, %s120
      %s123 = sphi 0, %s122
      %s137 = sphi 0, %s123
      %s141 = sphi 0, %s141
      %s143 = sphi 0, %s141
      %s144 = sphi 0, %s143
      %s158 = sphi 0, %s144
      %s162 = sphi 0, %s162
      %s164 = sphi 0, %s162
      %s165 = sphi 0, %s164
      %s179 = sphi 0, %s165
      %s183 = sphi 0, %s183
      %s185 = sphi 0, %s183
      %s186 = sphi 0, %s185
      %s200 = sphi 0, %s186
      %s204 = sphi 0, %s204
      %s206 = sphi 0, %s204
      %s207 = sphi 0, %s206
      %s221 = sphi 0, %s207
      %s227 = sphi 0, %s229
      %s230 = sphi 0, %s227
      %s231 = sphi 0, %s230
      %s247 = sphi 0, %s231
    $region4: #{tpu_custom_call.1} parent=1 // loop_header_branch
      %21 = sbr.rel (%p19) target = $region8
    $region5: #{tpu_custom_call.1} parent=1 // loop_body
      %s23 = ssub.s32 %s18, 1
      %s24 = ssub.s32 %s18, 2
      %s25 = sadd.s32 %s18, 1
      %s26 = ssub.s32 %s18, %s25
      %p27 = scmp.eq.s32.totalorder %s26, 0
      %s29 = sadd.s32 %s28, 1
      %s30 = scalar_select %p27, %s28, %s29
      %p33 = pneg %p27
      %p34 = scmp.eq.s32.totalorder %s18, 1
      %p35 = por %p33, %p34
      %p36 = scmp.ne.s32.totalorder %s28, %s31
      %p37 = scmp.eq.s32.totalorder %s18, 0
      %p38 = por %p36, %p37
      %p39 = scmp.ne.s32.totalorder %s28, %s31
      %p40 = scmp.eq.s32.totalorder %s23, 1
      %p41 = por %p39, %p40
      %p42 = scmp.ne.s32.totalorder %s31, %s32
      %p43 = scmp.eq.s32.totalorder %s23, 0
      %p44 = por %p42, %p43
      %p45 = scmp.ne.s32.totalorder %s31, %s32
      %p46 = scmp.eq.s32.totalorder %s24, 1
      %p47 = por %p45, %p46
      %p49 = scmp.ne.s32.totalorder %s32, %s48
      %p50 = scmp.eq.s32.totalorder %s24, 0
      %p51 = por %p49, %p50
      %s52 = ssub.s32 %s18, %s25
      %p53 = scmp.eq.s32.totalorder %s52, 0
      %s55 = sadd.s32 %s54, 1
      %s56 = scalar_select %p53, %s54, %s55
      %p59 = pneg %p53
      %p60 = scmp.eq.s32.totalorder %s18, 1
      %p61 = por %p59, %p60
      %p62 = scmp.ne.s32.totalorder %s54, %s57
      %p63 = scmp.eq.s32.totalorder %s18, 0
      %p64 = por %p62, %p63
      %p65 = scmp.ne.s32.totalorder %s54, %s57
      %p66 = scmp.eq.s32.totalorder %s23, 1
      %p67 = por %p65, %p66
      %p68 = scmp.ne.s32.totalorder %s57, %s58
      %p69 = scmp.eq.s32.totalorder %s23, 0
      %p70 = por %p68, %p69
      %p71 = scmp.ne.s32.totalorder %s57, %s58
      %p72 = scmp.eq.s32.totalorder %s24, 1
      %p73 = por %p71, %p72
      %p75 = scmp.ne.s32.totalorder %s58, %s74
      %p76 = scmp.eq.s32.totalorder %s24, 0
      %p77 = por %p75, %p76
      %s79 = sadd.s32 %s78, 1
      %p82 = scmp.eq.s32.totalorder %s18, 1
      %p83 = scmp.ne.s32.totalorder %s78, %s80
      %p84 = scmp.eq.s32.totalorder %s18, 0
      %p85 = por %p83, %p84
      %p86 = scmp.ne.s32.totalorder %s78, %s80
      %p87 = scmp.eq.s32.totalorder %s23, 1
      %p88 = por %p86, %p87
      %p89 = scmp.ne.s32.totalorder %s80, %s81
      %p90 = scmp.eq.s32.totalorder %s23, 0
      %p91 = por %p89, %p90
      %p92 = scmp.ne.s32.totalorder %s80, %s81
      %p93 = scmp.eq.s32.totalorder %s24, 1
      %p94 = por %p92, %p93
      %p96 = scmp.ne.s32.totalorder %s81, %s95
      %p97 = scmp.eq.s32.totalorder %s24, 0
      %p98 = por %p96, %p97
      %s100 = sadd.s32 %s99, 1
      %p103 = scmp.eq.s32.totalorder %s18, 1
      %p104 = scmp.ne.s32.totalorder %s99, %s101
      %p105 = scmp.eq.s32.totalorder %s18, 0
      %p106 = por %p104, %p105
      %p107 = scmp.ne.s32.totalorder %s99, %s101
      %p108 = scmp.eq.s32.totalorder %s23, 1
      %p109 = por %p107, %p108
      %p110 = scmp.ne.s32.totalorder %s101, %s102
      %p111 = scmp.eq.s32.totalorder %s23, 0
      %p112 = por %p110, %p111
      %p113 = scmp.ne.s32.totalorder %s101, %s102
      %p114 = scmp.eq.s32.totalorder %s24, 1
      %p115 = por %p113, %p114
      %p117 = scmp.ne.s32.totalorder %s102, %s116
      %p118 = scmp.eq.s32.totalorder %s24, 0
      %p119 = por %p117, %p118
      %s121 = sadd.s32 %s120, 1
      %p124 = scmp.eq.s32.totalorder %s18, 1
      %p125 = scmp.ne.s32.totalorder %s120, %s122
      %p126 = scmp.eq.s32.totalorder %s18, 0
      %p127 = por %p125, %p126
      %p128 = scmp.ne.s32.totalorder %s120, %s122
      %p129 = scmp.eq.s32.totalorder %s23, 1
      %p130 = por %p128, %p129
      %p131 = scmp.ne.s32.totalorder %s122, %s123
      %p132 = scmp.eq.s32.totalorder %s23, 0
      %p133 = por %p131, %p132
      %p134 = scmp.ne.s32.totalorder %s122, %s123
      %p135 = scmp.eq.s32.totalorder %s24, 1
      %p136 = por %p134, %p135
      %p138 = scmp.ne.s32.totalorder %s123, %s137
      %p139 = scmp.eq.s32.totalorder %s24, 0
      %p140 = por %p138, %p139
      %s142 = sadd.s32 %s141, 1
      %p145 = scmp.eq.s32.totalorder %s18, 1
      %p146 = scmp.ne.s32.totalorder %s141, %s143
      %p147 = scmp.eq.s32.totalorder %s18, 0
      %p148 = por %p146, %p147
      %p149 = scmp.ne.s32.totalorder %s141, %s143
      %p150 = scmp.eq.s32.totalorder %s23, 1
      %p151 = por %p149, %p150
      %p152 = scmp.ne.s32.totalorder %s143, %s144
      %p153 = scmp.eq.s32.totalorder %s23, 0
      %p154 = por %p152, %p153
      %p155 = scmp.ne.s32.totalorder %s143, %s144
      %p156 = scmp.eq.s32.totalorder %s24, 1
      %p157 = por %p155, %p156
      %p159 = scmp.ne.s32.totalorder %s144, %s158
      %p160 = scmp.eq.s32.totalorder %s24, 0
      %p161 = por %p159, %p160
      %s163 = sadd.s32 %s162, 1
      %p166 = scmp.eq.s32.totalorder %s18, 1
      %p167 = scmp.ne.s32.totalorder %s162, %s164
      %p168 = scmp.eq.s32.totalorder %s18, 0
      %p169 = por %p167, %p168
      %p170 = scmp.ne.s32.totalorder %s162, %s164
      %p171 = scmp.eq.s32.totalorder %s23, 1
      %p172 = por %p170, %p171
      %p173 = scmp.ne.s32.totalorder %s164, %s165
      %p174 = scmp.eq.s32.totalorder %s23, 0
      %p175 = por %p173, %p174
      %p176 = scmp.ne.s32.totalorder %s164, %s165
      %p177 = scmp.eq.s32.totalorder %s24, 1
      %p178 = por %p176, %p177
      %p180 = scmp.ne.s32.totalorder %s165, %s179
      %p181 = scmp.eq.s32.totalorder %s24, 0
      %p182 = por %p180, %p181
      %s184 = sadd.s32 %s183, 1
      %p187 = scmp.eq.s32.totalorder %s18, 1
      %p188 = scmp.ne.s32.totalorder %s183, %s185
      %p189 = scmp.eq.s32.totalorder %s18, 0
      %p190 = por %p188, %p189
      %p191 = scmp.ne.s32.totalorder %s183, %s185
      %p192 = scmp.eq.s32.totalorder %s23, 1
      %p193 = por %p191, %p192
      %p194 = scmp.ne.s32.totalorder %s185, %s186
      %p195 = scmp.eq.s32.totalorder %s23, 0
      %p196 = por %p194, %p195
      %p197 = scmp.ne.s32.totalorder %s185, %s186
      %p198 = scmp.eq.s32.totalorder %s24, 1
      %p199 = por %p197, %p198
      %p201 = scmp.ne.s32.totalorder %s186, %s200
      %p202 = scmp.eq.s32.totalorder %s24, 0
      %p203 = por %p201, %p202
      %s205 = sadd.s32 %s204, 1
      %p208 = scmp.eq.s32.totalorder %s18, 1
      %p209 = scmp.ne.s32.totalorder %s204, %s206
      %p210 = scmp.eq.s32.totalorder %s18, 0
      %p211 = por %p209, %p210
      %p212 = scmp.ne.s32.totalorder %s204, %s206
      %p213 = scmp.eq.s32.totalorder %s23, 1
      %p214 = por %p212, %p213
      %p215 = scmp.ne.s32.totalorder %s206, %s207
      %p216 = scmp.eq.s32.totalorder %s23, 0
      %p217 = por %p215, %p216
      %p218 = scmp.ne.s32.totalorder %s206, %s207
      %p219 = scmp.eq.s32.totalorder %s24, 1
      %p220 = por %p218, %p219
      %p222 = scmp.ne.s32.totalorder %s207, %s221
      %p223 = scmp.eq.s32.totalorder %s24, 0
      %p224 = por %p222, %p223
      %s225 = ssub.s32 %s18, %s25
      %p226 = scmp.eq.s32.totalorder %s225, 0
      %s228 = sadd.s32 %s227, 1
      %s229 = scalar_select %p226, %s227, %s228
      %p232 = pneg %p226
      %p233 = scmp.eq.s32.totalorder %s18, 1
      %p234 = por %p232, %p233
      %p235 = scmp.ne.s32.totalorder %s227, %s230
      %p236 = scmp.eq.s32.totalorder %s18, 0
      %p237 = por %p235, %p236
      %p238 = scmp.ne.s32.totalorder %s227, %s230
      %p239 = scmp.eq.s32.totalorder %s23, 1
      %p240 = por %p238, %p239
      %p241 = scmp.ne.s32.totalorder %s230, %s231
      %p242 = scmp.eq.s32.totalorder %s23, 0
      %p243 = por %p241, %p242
      %p244 = scmp.ne.s32.totalorder %s230, %s231
      %p245 = scmp.eq.s32.totalorder %s24, 1
      %p246 = por %p244, %p245
      %p248 = scmp.ne.s32.totalorder %s231, %s247
      %p249 = scmp.eq.s32.totalorder %s24, 0
      %p250 = por %p248, %p249
      %p251 = scmp.le.s32.totalorder 1, %s18
      %p252 = scmp.lt.s32.totalorder %s18, 3
      %p253 = pnand %p251, %p252
      %p254 = pneg %p253
      // Predicated region
      $region9: #{tpu_custom_call.1} parent=5 // pred_check
        _
      $region10: #{tpu_custom_call.1} parent=5 // pred_check_branch
        %256 = sbr.rel (%p253) target = $region12
      $region11: #{tpu_custom_call.1} parent=5 // pred_region
        %s257 = ssub.s32 %s18, 1
        // Predicated region
        $region13: #{tpu_custom_call.1} parent=11 // pred_check
          %p258 = pneg %p91
        $region14: #{tpu_custom_call.1} parent=11 // pred_check_branch
          %260 = sbr.rel (%p258) target = $region16
        $region15: #{tpu_custom_call.1} parent=11 // pred_region
          _
        $region16: #{tpu_custom_call.1} parent=11 // pred_fallthru
          _
        // Predicated region
        $region17: #{tpu_custom_call.1} parent=11 // pred_check
          %p261 = pneg %p112
        $region18: #{tpu_custom_call.1} parent=11 // pred_check_branch
          %263 = sbr.rel (%p261) target = $region20
        $region19: #{tpu_custom_call.1} parent=11 // pred_region
          _
        $region20: #{tpu_custom_call.1} parent=11 // pred_fallthru
          _
        // Predicated region
        $region21: #{tpu_custom_call.1} parent=11 // pred_check
          %p264 = pneg %p133
        $region22: #{tpu_custom_call.1} parent=11 // pred_check_branch
          %266 = sbr.rel (%p264) target = $region24
        $region23: #{tpu_custom_call.1} parent=11 // pred_region
          _
        $region24: #{tpu_custom_call.1} parent=11 // pred_fallthru
          _
        // Predicated region
        $region25: #{tpu_custom_call.1} parent=11 // pred_check
          %p267 = pneg %p154
        $region26: #{tpu_custom_call.1} parent=11 // pred_check_branch
          %269 = sbr.rel (%p267) target = $region28
        $region27: #{tpu_custom_call.1} parent=11 // pred_region
          _
        $region28: #{tpu_custom_call.1} parent=11 // pred_fallthru
          _
        // Predicated region
        $region29: #{tpu_custom_call.1} parent=11 // pred_check
          %p270 = pneg %p175
        $region30: #{tpu_custom_call.1} parent=11 // pred_check_branch
          %272 = sbr.rel (%p270) target = $region32
        $region31: #{tpu_custom_call.1} parent=11 // pred_region
          _
        $region32: #{tpu_custom_call.1} parent=11 // pred_fallthru
          _
        // Predicated region
        $region33: #{tpu_custom_call.1} parent=11 // pred_check
          %p273 = pneg %p196
        $region34: #{tpu_custom_call.1} parent=11 // pred_check_branch
          %275 = sbr.rel (%p273) target = $region36
        $region35: #{tpu_custom_call.1} parent=11 // pred_region
          _
        $region36: #{tpu_custom_call.1} parent=11 // pred_fallthru
          _
        // Predicated region
        $region37: #{tpu_custom_call.1} parent=11 // pred_check
          %p276 = pneg %p217
        $region38: #{tpu_custom_call.1} parent=11 // pred_check_branch
          %278 = sbr.rel (%p276) target = $region40
        $region39: #{tpu_custom_call.1} parent=11 // pred_region
          _
        $region40: #{tpu_custom_call.1} parent=11 // pred_fallthru
          _
      $region12: #{tpu_custom_call.1} parent=5 // pred_fallthru
        _
      %p279 = scmp.lt.s32.totalorder %s18, 2
      // Predicated region
      $region41: #{tpu_custom_call.1} parent=5 // pred_check
        %p280 = pneg %p279
      $region42: #{tpu_custom_call.1} parent=5 // pred_check_branch
        %282 = sbr.rel (%p280) target = $region44
      $region43: #{tpu_custom_call.1} parent=5 // pred_region
        // Predicated region
        $region45: #{tpu_custom_call.1} parent=43 // pred_check
          %p283 = pneg %p38
        $region46: #{tpu_custom_call.1} parent=43 // pred_check_branch
          %285 = sbr.rel (%p283) target = $region48
        $region47: #{tpu_custom_call.1} parent=43 // pred_region
          %p286 = scmp.lt.s32.totalorder %s18, 1
          %s287 = scalar_select %p286, %s18, 1
          %s288 = smul.addr %s287, 2
          %s289 = smul.addr %s288, 4
          %s290 = scalar_lea.vmem %s0, %s289
        $region48: #{tpu_custom_call.1} parent=43 // pred_fallthru
          _
        // Predicated region
        $region49: #{tpu_custom_call.1} parent=43 // pred_check
          %p291 = pneg %p64
        $region50: #{tpu_custom_call.1} parent=43 // pred_check_branch
          %293 = sbr.rel (%p291) target = $region52
        $region51: #{tpu_custom_call.1} parent=43 // pred_region
          %p294 = scmp.lt.s32.totalorder %s18, 1
          %s295 = scalar_select %p294, %s18, 1
          %s296 = smul.addr %s295, 2
          %s297 = smul.addr %s296, 4
          %s298 = scalar_lea.vmem %s1, %s297
        $region52: #{tpu_custom_call.1} parent=43 // pred_fallthru
          _
      $region44: #{tpu_custom_call.1} parent=5 // pred_fallthru
        _
      %p299 = scmp.le.s32.totalorder 1, %s18
      %p300 = scmp.lt.s32.totalorder %s18, 3
      %p301 = pnand %p299, %p300
      %p302 = pneg %p301
      // Predicated region
      $region53: #{tpu_custom_call.1} parent=5 // pred_check
        _
      $region54: #{tpu_custom_call.1} parent=5 // pred_check_branch
        %304 = sbr.rel (%p301) target = $region56
      $region55: #{tpu_custom_call.1} parent=5 // pred_region
        %s305 = ssub.s32 %s18, 1
        %p306 = scmp.lt.s32.totalorder %s23, 1
        %s307 = scalar_select %p306, %s23, 1
        %s308 = smul.addr %s307, 2
        %s309 = smul.addr %s308, 4
        %s310 = scalar_lea.vmem %s0, %s309
        %p311 = pneg %p44
        %p312 = pneg %p41
        %p313 = scmp.lt.s32.totalorder %s23, 1
        %s314 = scalar_select %p313, %s23, 1
        %s315 = smul.addr %s314, 2
        %s316 = smul.addr %s315, 4
        %s317 = scalar_lea.vmem %s1, %s316
        %p318 = pneg %p70
        %p319 = pneg %p67
        %p320 = pneg %p91
        %p321 = pneg %p88
        %p322 = pneg %p112
        %p323 = pneg %p109
        %p324 = pneg %p133
        %p325 = pneg %p130
        %p326 = pneg %p154
        %p327 = pneg %p151
        %p328 = pneg %p175
        %p329 = pneg %p172
        %p330 = pneg %p196
        %p331 = pneg %p193
        %p332 = pneg %p217
        %p333 = pneg %p214
        %p334 = pneg %p243
        %p335 = pneg %p240
        %s336 = sand.u32 %s230, 1
        %s337 = scalar_lea.sflag [#allocation3], %s336
        %s338 = sand.u32 %s230, 1
        %s339 = smul.addr %s338, 16
        %s340 = scalar_lea.vmem [#allocation2], %s339
        %p341 = scmp.lt.s32.totalorder %s23, 1
        %s342 = scalar_select %p341, %s23, 1
        %s343 = smul.addr %s342, 2
        %s344 = smul.addr %s343, 4
        %s345 = scalar_lea.vmem %s0, %s344
        %p346 = scmp.lt.s32.totalorder %s23, 1
        %s347 = scalar_select %p346, %s23, 1
        %s348 = smul.addr %s347, 2
        %s349 = smul.addr %s348, 4
        %s350 = scalar_lea.vmem %s1, %s349
        %v351 = vld [vmem:[%s345] sm:$0xff]
        %v352 = vld [vmem:[%s350] sm:$0xff]
        %v353 = vld [vmem:[%s2] sm:$0xff]
        %v354 = vld [vmem:[%s3] sm:$0xff]
        %356 = vst [vmem:[#allocation1] ss:$2 sm:$0xff] %v352
        %v357 = vld.sshfl [vmem:[#allocation1] sm:$0xff pattern:$0x75316420]
        %v358 = vld.sshfl [vmem:[#allocation1 + $0x8] sm:$0xff pattern:$0x75316420]
        %vm359 = vcmask 31744
        %v361 = vsel %vm359, %v354, 0
        %vm363 = vcmask 1043456
        %v364 = vsel %vm363, %v357, 0
        %v366 = vsel %vm363, %v358, 0
        %368 = vmatpush.msra.mxu0 0.0
        %369 = vmatpush.msra.mxu0 0.0
        %370 = vmatpush.msra.mxu0 0.0
        %371 = vmatpush.msra.mxu0 0.0
        %372 = vmatpush.msra.mxu0 0.0
        %373 = vmatpush.msra.mxu0 0.0
        %374 = vmatpush.msra.mxu0 0.0
        %375 = vmatpush.msra.mxu0 0.0
        %376 = vmatpush.msra.mxu0 0.0
        %377 = vmatpush.msra.mxu0 0.0
        %378 = vmatpush.msra.mxu0 0.0
        %379 = vmatpush.msra.mxu0 0.0
        %380 = vmatpush.msra.mxu0 0.0
        %381 = vmatpush.msra.mxu0 0.0
        %382 = vmatpush.msra.mxu0 0.0
        %383 = vmatpush.msra.mxu0 %v364
        %384 = vmatmul.f32.gmra.mxu0 %v361
        %v385 = vpop.f32.mrf.mxu0
        %v386 = vadd.f32 0.0, %v385
        %387 = vdwg.mxu0
        %388 = vmatpush.msra.mxu0 0.0
        %389 = vmatpush.msra.mxu0 0.0
        %390 = vmatpush.msra.mxu0 0.0
        %391 = vmatpush.msra.mxu0 0.0
        %392 = vmatpush.msra.mxu0 0.0
        %393 = vmatpush.msra.mxu0 0.0
        %394 = vmatpush.msra.mxu0 0.0
        %395 = vmatpush.msra.mxu0 0.0
        %396 = vmatpush.msra.mxu0 0.0
        %397 = vmatpush.msra.mxu0 0.0
        %398 = vmatpush.msra.mxu0 0.0
        %399 = vmatpush.msra.mxu0 0.0
        %400 = vmatpush.msra.mxu0 0.0
        %401 = vmatpush.msra.mxu0 0.0
        %402 = vmatpush.msra.mxu0 0.0
        %403 = vmatpush.msra.mxu0 %v366
        %404 = vmatmul.f32.gmra.mxu0 %v361
        %v405 = vpop.f32.mrf.mxu0
        %v406 = vadd.f32 0.0, %v405
        %407 = vdwg.mxu0
        %409 = vst [vmem:[#allocation1] ss:$2 sm:$0xff] %v351
        %v410 = vld.sshfl [vmem:[#allocation1] sm:$0xff pattern:$0x75316420]
        %v411 = vld.sshfl [vmem:[#allocation1 + $0x8] sm:$0xff pattern:$0x75316420]
        %v413 = vsel %vm359, %v353, 0
        %v415 = vsel %vm363, %v410, 0
        %v417 = vsel %vm363, %v411, 0
        %419 = vmatpush.msra.mxu0 0.0
        %420 = vmatpush.msra.mxu0 0.0
        %421 = vmatpush.msra.mxu0 0.0
        %422 = vmatpush.msra.mxu0 0.0
        %423 = vmatpush.msra.mxu0 0.0
        %424 = vmatpush.msra.mxu0 0.0
        %425 = vmatpush.msra.mxu0 0.0
        %426 = vmatpush.msra.mxu0 0.0
        %427 = vmatpush.msra.mxu0 0.0
        %428 = vmatpush.msra.mxu0 0.0
        %429 = vmatpush.msra.mxu0 0.0
        %430 = vmatpush.msra.mxu0 0.0
        %431 = vmatpush.msra.mxu0 0.0
        %432 = vmatpush.msra.mxu0 0.0
        %433 = vmatpush.msra.mxu0 0.0
        %434 = vmatpush.msra.mxu0 %v415
        %435 = vmatmul.f32.gmra.mxu0 %v413
        %v436 = vpop.f32.mrf.mxu0
        %v437 = vadd.f32 %v386, %v436
        %438 = vdwg.mxu0
        %439 = vmatpush.msra.mxu0 0.0
        %440 = vmatpush.msra.mxu0 0.0
        %441 = vmatpush.msra.mxu0 0.0
        %442 = vmatpush.msra.mxu0 0.0
        %443 = vmatpush.msra.mxu0 0.0
        %444 = vmatpush.msra.mxu0 0.0
        %445 = vmatpush.msra.mxu0 0.0
        %446 = vmatpush.msra.mxu0 0.0
        %447 = vmatpush.msra.mxu0 0.0
        %448 = vmatpush.msra.mxu0 0.0
        %449 = vmatpush.msra.mxu0 0.0
        %450 = vmatpush.msra.mxu0 0.0
        %451 = vmatpush.msra.mxu0 0.0
        %452 = vmatpush.msra.mxu0 0.0
        %453 = vmatpush.msra.mxu0 0.0
        %454 = vmatpush.msra.mxu0 %v417
        %455 = vmatmul.f32.gmra.mxu0 %v413
        %v456 = vpop.f32.mrf.mxu0
        %v457 = vadd.f32 %v406, %v456
        %458 = vdwg.mxu0
        %v459 = vld [vmem:[%s4] sm:$0xff]
        %461 = vset.pattern.permute.xlu0 0
        %462 = vperm.xlu0 %461, %v459
        %v463 = vpop.permute.xlu0 %462
        %v465 = vadd.f32 %v437, %v463
        %v466 = vadd.f32 %v457, %v463
        %v467 = vmax.f32 %v465, 0.0
        %v468 = vmax.f32 %v466, 0.0
        %469 = vrot.lane.b32.xlu0 %v467, 17
        %v470 = vpop.permute.xlu0 %469
        %471 = vrot.lane.b32.xlu0 %v468, 17
        %v472 = vpop.permute.xlu0 %471
        %v473 = vlaneseq
        %v474 = vand.u32 %v473, 127
        %vm475 = vcmp.lt.s32.totalorder %v474, 17
        %v476 = vsel %vm475, %v470, %v472
        %v477 = vsel %vm475, %v472, %v470
        %v478 = vld [vmem:[%s6] sm:$0x3]
        %v480 = vperm.slane %v478, 0
        %v481 = vperm.slane %v478, 1
        %v484 = vmul.f32 %v477, %v480
        %v485 = vmul.f32 %v476, %v481
        %v486 = vld [vmem:[%s5] sm:$0xff]
        %487 = vrot.lane.b32.xlu0 %v467, 16
        %v488 = vpop.permute.xlu0 %487
        %489 = vrot.lane.b32.xlu0 %v468, 16
        %v490 = vpop.permute.xlu0 %489
        %vm491 = vcmp.lt.s32.totalorder %v474, 16
        %v492 = vsel %vm491, %v488, %v490
        %v493 = vsel %vm491, %v490, %v488
        %s494 = scalar_lea.vmem %s6, 2
        %v495 = vld [vmem:[%s494] sm:$0x3]
        %v497 = vperm.slane %v495, 0
        %v498 = vperm.slane %v495, 1
        %v501 = vmul.f32 %v493, %v497
        %v502 = vmul.f32 %v492, %v498
        %s503 = scalar_lea.vmem %s5, 8
        %v504 = vld [vmem:[%s503] sm:$0xff]
        %vm505 = vcmask 64512
        %v507 = vsel %vm505, %v504, 0
        %509 = vmatpush.msra.mxu0 0.0
        %510 = vmatpush.msra.mxu0 0.0
        %511 = vmatpush.msra.mxu0 0.0
        %512 = vmatpush.msra.mxu0 0.0
        %513 = vmatpush.msra.mxu0 0.0
        %514 = vmatpush.msra.mxu0 0.0
        %515 = vmatpush.msra.mxu0 0.0
        %516 = vmatpush.msra.mxu0 0.0
        %517 = vmatpush.msra.mxu0 0.0
        %518 = vmatpush.msra.mxu0 0.0
        %519 = vmatpush.msra.mxu0 0.0
        %520 = vmatpush.msra.mxu0 0.0
        %521 = vmatpush.msra.mxu0 0.0
        %522 = vmatpush.msra.mxu0 0.0
        %523 = vmatpush.msra.mxu0 0.0
        %524 = vmatpush.msra.mxu0 %v501
        %525 = vmatmul.f32.gmra.mxu0 %v507
        %v526 = vpop.f32.mrf.mxu0
        %v527 = vadd.f32 0.0, %v526
        %528 = vdwg.mxu0
        %529 = vmatpush.msra.mxu0 0.0
        %530 = vmatpush.msra.mxu0 0.0
        %531 = vmatpush.msra.mxu0 0.0
        %532 = vmatpush.msra.mxu0 0.0
        %533 = vmatpush.msra.mxu0 0.0
        %534 = vmatpush.msra.mxu0 0.0
        %535 = vmatpush.msra.mxu0 0.0
        %536 = vmatpush.msra.mxu0 0.0
        %537 = vmatpush.msra.mxu0 0.0
        %538 = vmatpush.msra.mxu0 0.0
        %539 = vmatpush.msra.mxu0 0.0
        %540 = vmatpush.msra.mxu0 0.0
        %541 = vmatpush.msra.mxu0 0.0
        %542 = vmatpush.msra.mxu0 0.0
        %543 = vmatpush.msra.mxu0 0.0
        %544 = vmatpush.msra.mxu0 %v502
        %545 = vmatmul.f32.gmra.mxu0 %v507
        %v546 = vpop.f32.mrf.mxu0
        %v547 = vadd.f32 0.0, %v546
        %548 = vdwg.mxu0
        %v550 = vsel %vm505, %v486, 0
        %552 = vmatpush.msra.mxu0 0.0
        %553 = vmatpush.msra.mxu0 0.0
        %554 = vmatpush.msra.mxu0 0.0
        %555 = vmatpush.msra.mxu0 0.0
        %556 = vmatpush.msra.mxu0 0.0
        %557 = vmatpush.msra.mxu0 0.0
        %558 = vmatpush.msra.mxu0 0.0
        %559 = vmatpush.msra.mxu0 0.0
        %560 = vmatpush.msra.mxu0 0.0
        %561 = vmatpush.msra.mxu0 0.0
        %562 = vmatpush.msra.mxu0 0.0
        %563 = vmatpush.msra.mxu0 0.0
        %564 = vmatpush.msra.mxu0 0.0
        %565 = vmatpush.msra.mxu0 0.0
        %566 = vmatpush.msra.mxu0 0.0
        %567 = vmatpush.msra.mxu0 %v484
        %568 = vmatmul.f32.gmra.mxu0 %v550
        %v569 = vpop.f32.mrf.mxu0
        %v570 = vadd.f32 %v527, %v569
        %571 = vdwg.mxu0
        %572 = vmatpush.msra.mxu0 0.0
        %573 = vmatpush.msra.mxu0 0.0
        %574 = vmatpush.msra.mxu0 0.0
        %575 = vmatpush.msra.mxu0 0.0
        %576 = vmatpush.msra.mxu0 0.0
        %577 = vmatpush.msra.mxu0 0.0
        %578 = vmatpush.msra.mxu0 0.0
        %579 = vmatpush.msra.mxu0 0.0
        %580 = vmatpush.msra.mxu0 0.0
        %581 = vmatpush.msra.mxu0 0.0
        %582 = vmatpush.msra.mxu0 0.0
        %583 = vmatpush.msra.mxu0 0.0
        %584 = vmatpush.msra.mxu0 0.0
        %585 = vmatpush.msra.mxu0 0.0
        %586 = vmatpush.msra.mxu0 0.0
        %587 = vmatpush.msra.mxu0 %v485
        %588 = vmatmul.f32.gmra.mxu0 %v550
        %v589 = vpop.f32.mrf.mxu0
        %v590 = vadd.f32 %v547, %v589
        %591 = vdwg.mxu0
        %592 = vrot.lane.b32.xlu0 %v467, 15
        %v593 = vpop.permute.xlu0 %592
        %594 = vrot.lane.b32.xlu0 %v468, 15
        %v595 = vpop.permute.xlu0 %594
        %vm596 = vcmp.lt.s32.totalorder %v474, 15
        %v597 = vsel %vm596, %v593, %v595
        %v598 = vsel %vm596, %v595, %v593
        %s599 = scalar_lea.vmem %s6, 4
        %v600 = vld [vmem:[%s599] sm:$0x3]
        %v602 = vperm.slane %v600, 0
        %v603 = vperm.slane %v600, 1
        %v606 = vmul.f32 %v598, %v602
        %v607 = vmul.f32 %v597, %v603
        %s608 = scalar_lea.vmem %s5, 16
        %v609 = vld [vmem:[%s608] sm:$0xff]
        %v611 = vsel %vm505, %v609, 0
        %613 = vmatpush.msra.mxu0 0.0
        %614 = vmatpush.msra.mxu0 0.0
        %615 = vmatpush.msra.mxu0 0.0
        %616 = vmatpush.msra.mxu0 0.0
        %617 = vmatpush.msra.mxu0 0.0
        %618 = vmatpush.msra.mxu0 0.0
        %619 = vmatpush.msra.mxu0 0.0
        %620 = vmatpush.msra.mxu0 0.0
        %621 = vmatpush.msra.mxu0 0.0
        %622 = vmatpush.msra.mxu0 0.0
        %623 = vmatpush.msra.mxu0 0.0
        %624 = vmatpush.msra.mxu0 0.0
        %625 = vmatpush.msra.mxu0 0.0
        %626 = vmatpush.msra.mxu0 0.0
        %627 = vmatpush.msra.mxu0 0.0
        %628 = vmatpush.msra.mxu0 %v606
        %629 = vmatmul.f32.gmra.mxu0 %v611
        %v630 = vpop.f32.mrf.mxu0
        %v631 = vadd.f32 0.0, %v630
        %632 = vdwg.mxu0
        %633 = vmatpush.msra.mxu0 0.0
        %634 = vmatpush.msra.mxu0 0.0
        %635 = vmatpush.msra.mxu0 0.0
        %636 = vmatpush.msra.mxu0 0.0
        %637 = vmatpush.msra.mxu0 0.0
        %638 = vmatpush.msra.mxu0 0.0
        %639 = vmatpush.msra.mxu0 0.0
        %640 = vmatpush.msra.mxu0 0.0
        %641 = vmatpush.msra.mxu0 0.0
        %642 = vmatpush.msra.mxu0 0.0
        %643 = vmatpush.msra.mxu0 0.0
        %644 = vmatpush.msra.mxu0 0.0
        %645 = vmatpush.msra.mxu0 0.0
        %646 = vmatpush.msra.mxu0 0.0
        %647 = vmatpush.msra.mxu0 0.0
        %648 = vmatpush.msra.mxu0 %v607
        %649 = vmatmul.f32.gmra.mxu0 %v611
        %v650 = vpop.f32.mrf.mxu0
        %v651 = vadd.f32 0.0, %v650
        %652 = vdwg.mxu0
        %v653 = vadd.f32 %v570, %v631
        %v654 = vadd.f32 %v590, %v651
        %655 = vrot.lane.b32.xlu0 %v467, 1
        %v656 = vpop.permute.xlu0 %655
        %657 = vrot.lane.b32.xlu0 %v468, 1
        %v658 = vpop.permute.xlu0 %657
        %vm659 = vcmp.lt.s32.totalorder %v474, 1
        %v660 = vsel %vm659, %v656, %v658
        %v661 = vsel %vm659, %v658, %v656
        %s662 = scalar_lea.vmem %s6, 6
        %v663 = vld [vmem:[%s662] sm:$0x3]
        %v665 = vperm.slane %v663, 0
        %v666 = vperm.slane %v663, 1
        %v669 = vmul.f32 %v661, %v665
        %v670 = vmul.f32 %v660, %v666
        %s671 = scalar_lea.vmem %s5, 24
        %v672 = vld [vmem:[%s671] sm:$0xff]
        %v674 = vsel %vm505, %v672, 0
        %676 = vmatpush.msra.mxu0 0.0
        %677 = vmatpush.msra.mxu0 0.0
        %678 = vmatpush.msra.mxu0 0.0
        %679 = vmatpush.msra.mxu0 0.0
        %680 = vmatpush.msra.mxu0 0.0
        %681 = vmatpush.msra.mxu0 0.0
        %682 = vmatpush.msra.mxu0 0.0
        %683 = vmatpush.msra.mxu0 0.0
        %684 = vmatpush.msra.mxu0 0.0
        %685 = vmatpush.msra.mxu0 0.0
        %686 = vmatpush.msra.mxu0 0.0
        %687 = vmatpush.msra.mxu0 0.0
        %688 = vmatpush.msra.mxu0 0.0
        %689 = vmatpush.msra.mxu0 0.0
        %690 = vmatpush.msra.mxu0 0.0
        %691 = vmatpush.msra.mxu0 %v669
        %692 = vmatmul.f32.gmra.mxu0 %v674
        %v693 = vpop.f32.mrf.mxu0
        %v694 = vadd.f32 0.0, %v693
        %695 = vdwg.mxu0
        %696 = vmatpush.msra.mxu0 0.0
        %697 = vmatpush.msra.mxu0 0.0
        %698 = vmatpush.msra.mxu0 0.0
        %699 = vmatpush.msra.mxu0 0.0
        %700 = vmatpush.msra.mxu0 0.0
        %701 = vmatpush.msra.mxu0 0.0
        %702 = vmatpush.msra.mxu0 0.0
        %703 = vmatpush.msra.mxu0 0.0
        %704 = vmatpush.msra.mxu0 0.0
        %705 = vmatpush.msra.mxu0 0.0
        %706 = vmatpush.msra.mxu0 0.0
        %707 = vmatpush.msra.mxu0 0.0
        %708 = vmatpush.msra.mxu0 0.0
        %709 = vmatpush.msra.mxu0 0.0
        %710 = vmatpush.msra.mxu0 0.0
        %711 = vmatpush.msra.mxu0 %v670
        %712 = vmatmul.f32.gmra.mxu0 %v674
        %v713 = vpop.f32.mrf.mxu0
        %v714 = vadd.f32 0.0, %v713
        %715 = vdwg.mxu0
        %v716 = vadd.f32 %v653, %v694
        %v717 = vadd.f32 %v654, %v714
        %s718 = scalar_lea.vmem %s5, 32
        %v719 = vld [vmem:[%s718] sm:$0xff]
        %v721 = vsel %vm505, %v719, 0
        %723 = vmatpush.msra.mxu0 0.0
        %724 = vmatpush.msra.mxu0 0.0
        %725 = vmatpush.msra.mxu0 0.0
        %726 = vmatpush.msra.mxu0 0.0
        %727 = vmatpush.msra.mxu0 0.0
        %728 = vmatpush.msra.mxu0 0.0
        %729 = vmatpush.msra.mxu0 0.0
        %730 = vmatpush.msra.mxu0 0.0
        %731 = vmatpush.msra.mxu0 0.0
        %732 = vmatpush.msra.mxu0 0.0
        %733 = vmatpush.msra.mxu0 0.0
        %734 = vmatpush.msra.mxu0 0.0
        %735 = vmatpush.msra.mxu0 0.0
        %736 = vmatpush.msra.mxu0 0.0
        %737 = vmatpush.msra.mxu0 0.0
        %738 = vmatpush.msra.mxu0 %v467
        %739 = vmatmul.f32.gmra.mxu0 %v721
        %v740 = vpop.f32.mrf.mxu0
        %v741 = vadd.f32 0.0, %v740
        %742 = vdwg.mxu0
        %743 = vmatpush.msra.mxu0 0.0
        %744 = vmatpush.msra.mxu0 0.0
        %745 = vmatpush.msra.mxu0 0.0
        %746 = vmatpush.msra.mxu0 0.0
        %747 = vmatpush.msra.mxu0 0.0
        %748 = vmatpush.msra.mxu0 0.0
        %749 = vmatpush.msra.mxu0 0.0
        %750 = vmatpush.msra.mxu0 0.0
        %751 = vmatpush.msra.mxu0 0.0
        %752 = vmatpush.msra.mxu0 0.0
        %753 = vmatpush.msra.mxu0 0.0
        %754 = vmatpush.msra.mxu0 0.0
        %755 = vmatpush.msra.mxu0 0.0
        %756 = vmatpush.msra.mxu0 0.0
        %757 = vmatpush.msra.mxu0 0.0
        %758 = vmatpush.msra.mxu0 %v468
        %759 = vmatmul.f32.gmra.mxu0 %v721
        %v760 = vpop.f32.mrf.mxu0
        %v761 = vadd.f32 0.0, %v760
        %762 = vdwg.mxu0
        %v763 = vadd.f32 %v716, %v741
        %v764 = vadd.f32 %v717, %v761
        %765 = vrot.lane.b32.xlu0 %v467, 127
        %v766 = vpop.permute.xlu0 %765
        %767 = vrot.lane.b32.xlu0 %v468, 127
        %v768 = vpop.permute.xlu0 %767
        %vm769 = vcmp.lt.s32.totalorder %v474, 127
        %v770 = vsel %vm769, %v766, %v768
        %v771 = vsel %vm769, %v768, %v766
        %s772 = scalar_lea.vmem %s6, 10
        %v773 = vld [vmem:[%s772] sm:$0x3]
        %v775 = vperm.slane %v773, 0
        %v776 = vperm.slane %v773, 1
        %v779 = vmul.f32 %v770, %v775
        %v780 = vmul.f32 %v771, %v776
        %s781 = scalar_lea.vmem %s5, 40
        %v782 = vld [vmem:[%s781] sm:$0xff]
        %v784 = vsel %vm505, %v782, 0
        %786 = vmatpush.msra.mxu0 0.0
        %787 = vmatpush.msra.mxu0 0.0
        %788 = vmatpush.msra.mxu0 0.0
        %789 = vmatpush.msra.mxu0 0.0
        %790 = vmatpush.msra.mxu0 0.0
        %791 = vmatpush.msra.mxu0 0.0
        %792 = vmatpush.msra.mxu0 0.0
        %793 = vmatpush.msra.mxu0 0.0
        %794 = vmatpush.msra.mxu0 0.0
        %795 = vmatpush.msra.mxu0 0.0
        %796 = vmatpush.msra.mxu0 0.0
        %797 = vmatpush.msra.mxu0 0.0
        %798 = vmatpush.msra.mxu0 0.0
        %799 = vmatpush.msra.mxu0 0.0
        %800 = vmatpush.msra.mxu0 0.0
        %801 = vmatpush.msra.mxu0 %v779
        %802 = vmatmul.f32.gmra.mxu0 %v784
        %v803 = vpop.f32.mrf.mxu0
        %v804 = vadd.f32 0.0, %v803
        %805 = vdwg.mxu0
        %806 = vmatpush.msra.mxu0 0.0
        %807 = vmatpush.msra.mxu0 0.0
        %808 = vmatpush.msra.mxu0 0.0
        %809 = vmatpush.msra.mxu0 0.0
        %810 = vmatpush.msra.mxu0 0.0
        %811 = vmatpush.msra.mxu0 0.0
        %812 = vmatpush.msra.mxu0 0.0
        %813 = vmatpush.msra.mxu0 0.0
        %814 = vmatpush.msra.mxu0 0.0
        %815 = vmatpush.msra.mxu0 0.0
        %816 = vmatpush.msra.mxu0 0.0
        %817 = vmatpush.msra.mxu0 0.0
        %818 = vmatpush.msra.mxu0 0.0
        %819 = vmatpush.msra.mxu0 0.0
        %820 = vmatpush.msra.mxu0 0.0
        %821 = vmatpush.msra.mxu0 %v780
        %822 = vmatmul.f32.gmra.mxu0 %v784
        %v823 = vpop.f32.mrf.mxu0
        %v824 = vadd.f32 0.0, %v823
        %825 = vdwg.mxu0
        %v826 = vadd.f32 %v763, %v804
        %v827 = vadd.f32 %v764, %v824
        %828 = vrot.lane.b32.xlu0 %v467, 113
        %v829 = vpop.permute.xlu0 %828
        %830 = vrot.lane.b32.xlu0 %v468, 113
        %v831 = vpop.permute.xlu0 %830
        %vm832 = vcmp.lt.s32.totalorder %v474, 113
        %v833 = vsel %vm832, %v829, %v831
        %v834 = vsel %vm832, %v831, %v829
        %s835 = scalar_lea.vmem %s6, 12
        %v836 = vld [vmem:[%s835] sm:$0x3]
        %v838 = vperm.slane %v836, 0
        %v839 = vperm.slane %v836, 1
        %v842 = vmul.f32 %v833, %v838
        %v843 = vmul.f32 %v834, %v839
        %s844 = scalar_lea.vmem %s5, 48
        %v845 = vld [vmem:[%s844] sm:$0xff]
        %v847 = vsel %vm505, %v845, 0
        %849 = vmatpush.msra.mxu0 0.0
        %850 = vmatpush.msra.mxu0 0.0
        %851 = vmatpush.msra.mxu0 0.0
        %852 = vmatpush.msra.mxu0 0.0
        %853 = vmatpush.msra.mxu0 0.0
        %854 = vmatpush.msra.mxu0 0.0
        %855 = vmatpush.msra.mxu0 0.0
        %856 = vmatpush.msra.mxu0 0.0
        %857 = vmatpush.msra.mxu0 0.0
        %858 = vmatpush.msra.mxu0 0.0
        %859 = vmatpush.msra.mxu0 0.0
        %860 = vmatpush.msra.mxu0 0.0
        %861 = vmatpush.msra.mxu0 0.0
        %862 = vmatpush.msra.mxu0 0.0
        %863 = vmatpush.msra.mxu0 0.0
        %864 = vmatpush.msra.mxu0 %v842
        %865 = vmatmul.f32.gmra.mxu0 %v847
        %v866 = vpop.f32.mrf.mxu0
        %v867 = vadd.f32 0.0, %v866
        %868 = vdwg.mxu0
        %869 = vmatpush.msra.mxu0 0.0
        %870 = vmatpush.msra.mxu0 0.0
        %871 = vmatpush.msra.mxu0 0.0
        %872 = vmatpush.msra.mxu0 0.0
        %873 = vmatpush.msra.mxu0 0.0
        %874 = vmatpush.msra.mxu0 0.0
        %875 = vmatpush.msra.mxu0 0.0
        %876 = vmatpush.msra.mxu0 0.0
        %877 = vmatpush.msra.mxu0 0.0
        %878 = vmatpush.msra.mxu0 0.0
        %879 = vmatpush.msra.mxu0 0.0
        %880 = vmatpush.msra.mxu0 0.0
        %881 = vmatpush.msra.mxu0 0.0
        %882 = vmatpush.msra.mxu0 0.0
        %883 = vmatpush.msra.mxu0 0.0
        %884 = vmatpush.msra.mxu0 %v843
        %885 = vmatmul.f32.gmra.mxu0 %v847
        %v886 = vpop.f32.mrf.mxu0
        %v887 = vadd.f32 0.0, %v886
        %888 = vdwg.mxu0
        %v889 = vadd.f32 %v826, %v867
        %v890 = vadd.f32 %v827, %v887
        %891 = vrot.lane.b32.xlu0 %v467, 112
        %v892 = vpop.permute.xlu0 %891
        %893 = vrot.lane.b32.xlu0 %v468, 112
        %v894 = vpop.permute.xlu0 %893
        %vm895 = vcmp.lt.s32.totalorder %v474, 112
        %v896 = vsel %vm895, %v892, %v894
        %v897 = vsel %vm895, %v894, %v892
        %s898 = scalar_lea.vmem %s6, 14
        %v899 = vld [vmem:[%s898] sm:$0x3]
        %v901 = vperm.slane %v899, 0
        %v902 = vperm.slane %v899, 1
        %v905 = vmul.f32 %v896, %v901
        %v906 = vmul.f32 %v897, %v902
        %s907 = scalar_lea.vmem %s5, 56
        %v908 = vld [vmem:[%s907] sm:$0xff]
        %v910 = vsel %vm505, %v908, 0
        %912 = vmatpush.msra.mxu0 0.0
        %913 = vmatpush.msra.mxu0 0.0
        %914 = vmatpush.msra.mxu0 0.0
        %915 = vmatpush.msra.mxu0 0.0
        %916 = vmatpush.msra.mxu0 0.0
        %917 = vmatpush.msra.mxu0 0.0
        %918 = vmatpush.msra.mxu0 0.0
        %919 = vmatpush.msra.mxu0 0.0
        %920 = vmatpush.msra.mxu0 0.0
        %921 = vmatpush.msra.mxu0 0.0
        %922 = vmatpush.msra.mxu0 0.0
        %923 = vmatpush.msra.mxu0 0.0
        %924 = vmatpush.msra.mxu0 0.0
        %925 = vmatpush.msra.mxu0 0.0
        %926 = vmatpush.msra.mxu0 0.0
        %927 = vmatpush.msra.mxu0 %v905
        %928 = vmatmul.f32.gmra.mxu0 %v910
        %v929 = vpop.f32.mrf.mxu0
        %v930 = vadd.f32 0.0, %v929
        %931 = vdwg.mxu0
        %932 = vmatpush.msra.mxu0 0.0
        %933 = vmatpush.msra.mxu0 0.0
        %934 = vmatpush.msra.mxu0 0.0
        %935 = vmatpush.msra.mxu0 0.0
        %936 = vmatpush.msra.mxu0 0.0
        %937 = vmatpush.msra.mxu0 0.0
        %938 = vmatpush.msra.mxu0 0.0
        %939 = vmatpush.msra.mxu0 0.0
        %940 = vmatpush.msra.mxu0 0.0
        %941 = vmatpush.msra.mxu0 0.0
        %942 = vmatpush.msra.mxu0 0.0
        %943 = vmatpush.msra.mxu0 0.0
        %944 = vmatpush.msra.mxu0 0.0
        %945 = vmatpush.msra.mxu0 0.0
        %946 = vmatpush.msra.mxu0 0.0
        %947 = vmatpush.msra.mxu0 %v906
        %948 = vmatmul.f32.gmra.mxu0 %v910
        %v949 = vpop.f32.mrf.mxu0
        %v950 = vadd.f32 0.0, %v949
        %951 = vdwg.mxu0
        %v952 = vadd.f32 %v889, %v930
        %v953 = vadd.f32 %v890, %v950
        %954 = vrot.lane.b32.xlu0 %v467, 111
        %v955 = vpop.permute.xlu0 %954
        %956 = vrot.lane.b32.xlu0 %v468, 111
        %v957 = vpop.permute.xlu0 %956
        %vm958 = vcmp.lt.s32.totalorder %v474, 111
        %v959 = vsel %vm958, %v955, %v957
        %v960 = vsel %vm958, %v957, %v955
        %s961 = scalar_lea.vmem %s6, 16
        %v962 = vld [vmem:[%s961] sm:$0x3]
        %v964 = vperm.slane %v962, 0
        %v965 = vperm.slane %v962, 1
        %v968 = vmul.f32 %v959, %v964
        %v969 = vmul.f32 %v960, %v965
        %s970 = scalar_lea.vmem %s5, 64
        %v971 = vld [vmem:[%s970] sm:$0xff]
        %v973 = vsel %vm505, %v971, 0
        %975 = vmatpush.msra.mxu0 0.0
        %976 = vmatpush.msra.mxu0 0.0
        %977 = vmatpush.msra.mxu0 0.0
        %978 = vmatpush.msra.mxu0 0.0
        %979 = vmatpush.msra.mxu0 0.0
        %980 = vmatpush.msra.mxu0 0.0
        %981 = vmatpush.msra.mxu0 0.0
        %982 = vmatpush.msra.mxu0 0.0
        %983 = vmatpush.msra.mxu0 0.0
        %984 = vmatpush.msra.mxu0 0.0
        %985 = vmatpush.msra.mxu0 0.0
        %986 = vmatpush.msra.mxu0 0.0
        %987 = vmatpush.msra.mxu0 0.0
        %988 = vmatpush.msra.mxu0 0.0
        %989 = vmatpush.msra.mxu0 0.0
        %990 = vmatpush.msra.mxu0 %v968
        %991 = vmatmul.f32.gmra.mxu0 %v973
        %v992 = vpop.f32.mrf.mxu0
        %v993 = vadd.f32 0.0, %v992
        %994 = vdwg.mxu0
        %995 = vmatpush.msra.mxu0 0.0
        %996 = vmatpush.msra.mxu0 0.0
        %997 = vmatpush.msra.mxu0 0.0
        %998 = vmatpush.msra.mxu0 0.0
        %999 = vmatpush.msra.mxu0 0.0
        %1000 = vmatpush.msra.mxu0 0.0
        %1001 = vmatpush.msra.mxu0 0.0
        %1002 = vmatpush.msra.mxu0 0.0
        %1003 = vmatpush.msra.mxu0 0.0
        %1004 = vmatpush.msra.mxu0 0.0
        %1005 = vmatpush.msra.mxu0 0.0
        %1006 = vmatpush.msra.mxu0 0.0
        %1007 = vmatpush.msra.mxu0 0.0
        %1008 = vmatpush.msra.mxu0 0.0
        %1009 = vmatpush.msra.mxu0 0.0
        %1010 = vmatpush.msra.mxu0 %v969
        %1011 = vmatmul.f32.gmra.mxu0 %v973
        %v1012 = vpop.f32.mrf.mxu0
        %v1013 = vadd.f32 0.0, %v1012
        %1014 = vdwg.mxu0
        %v1015 = vadd.f32 %v952, %v993
        %v1016 = vadd.f32 %v953, %v1013
        %1017 = vrot.lane.b32.xlu0 %v467, 34
        %v1018 = vpop.permute.xlu0 %1017
        %1019 = vrot.lane.b32.xlu0 %v468, 34
        %v1020 = vpop.permute.xlu0 %1019
        %vm1021 = vcmp.lt.s32.totalorder %v474, 34
        %v1022 = vsel %vm1021, %v1018, %v1020
        %v1023 = vsel %vm1021, %v1020, %v1018
        %s1024 = scalar_lea.vmem %s6, 18
        %v1025 = vld [vmem:[%s1024] sm:$0x3]
        %v1027 = vperm.slane %v1025, 0
        %v1028 = vperm.slane %v1025, 1
        %v1031 = vmul.f32 %v1023, %v1027
        %v1032 = vmul.f32 %v1022, %v1028
        %s1033 = scalar_lea.vmem %s5, 72
        %v1034 = vld [vmem:[%s1033] sm:$0xff]
        %v1036 = vsel %vm505, %v1034, 0
        %1038 = vmatpush.msra.mxu0 0.0
        %1039 = vmatpush.msra.mxu0 0.0
        %1040 = vmatpush.msra.mxu0 0.0
        %1041 = vmatpush.msra.mxu0 0.0
        %1042 = vmatpush.msra.mxu0 0.0
        %1043 = vmatpush.msra.mxu0 0.0
        %1044 = vmatpush.msra.mxu0 0.0
        %1045 = vmatpush.msra.mxu0 0.0
        %1046 = vmatpush.msra.mxu0 0.0
        %1047 = vmatpush.msra.mxu0 0.0
        %1048 = vmatpush.msra.mxu0 0.0
        %1049 = vmatpush.msra.mxu0 0.0
        %1050 = vmatpush.msra.mxu0 0.0
        %1051 = vmatpush.msra.mxu0 0.0
        %1052 = vmatpush.msra.mxu0 0.0
        %1053 = vmatpush.msra.mxu0 %v1031
        %1054 = vmatmul.f32.gmra.mxu0 %v1036
        %v1055 = vpop.f32.mrf.mxu0
        %v1056 = vadd.f32 0.0, %v1055
        %1057 = vdwg.mxu0
        %1058 = vmatpush.msra.mxu0 0.0
        %1059 = vmatpush.msra.mxu0 0.0
        %1060 = vmatpush.msra.mxu0 0.0
        %1061 = vmatpush.msra.mxu0 0.0
        %1062 = vmatpush.msra.mxu0 0.0
        %1063 = vmatpush.msra.mxu0 0.0
        %1064 = vmatpush.msra.mxu0 0.0
        %1065 = vmatpush.msra.mxu0 0.0
        %1066 = vmatpush.msra.mxu0 0.0
        %1067 = vmatpush.msra.mxu0 0.0
        %1068 = vmatpush.msra.mxu0 0.0
        %1069 = vmatpush.msra.mxu0 0.0
        %1070 = vmatpush.msra.mxu0 0.0
        %1071 = vmatpush.msra.mxu0 0.0
        %1072 = vmatpush.msra.mxu0 0.0
        %1073 = vmatpush.msra.mxu0 %v1032
        %1074 = vmatmul.f32.gmra.mxu0 %v1036
        %v1075 = vpop.f32.mrf.mxu0
        %v1076 = vadd.f32 0.0, %v1075
        %1077 = vdwg.mxu0
        %v1078 = vadd.f32 %v1015, %v1056
        %v1079 = vadd.f32 %v1016, %v1076
        %1080 = vrot.lane.b32.xlu0 %v467, 32
        %v1081 = vpop.permute.xlu0 %1080
        %1082 = vrot.lane.b32.xlu0 %v468, 32
        %v1083 = vpop.permute.xlu0 %1082
        %vm1084 = vcmp.lt.s32.totalorder %v474, 32
        %v1085 = vsel %vm1084, %v1081, %v1083
        %v1086 = vsel %vm1084, %v1083, %v1081
        %s1087 = scalar_lea.vmem %s6, 20
        %v1088 = vld [vmem:[%s1087] sm:$0x3]
        %v1090 = vperm.slane %v1088, 0
        %v1091 = vperm.slane %v1088, 1
        %v1094 = vmul.f32 %v1086, %v1090
        %v1095 = vmul.f32 %v1085, %v1091
        %s1096 = scalar_lea.vmem %s5, 80
        %v1097 = vld [vmem:[%s1096] sm:$0xff]
        %v1099 = vsel %vm505, %v1097, 0
        %1101 = vmatpush.msra.mxu0 0.0
        %1102 = vmatpush.msra.mxu0 0.0
        %1103 = vmatpush.msra.mxu0 0.0
        %1104 = vmatpush.msra.mxu0 0.0
        %1105 = vmatpush.msra.mxu0 0.0
        %1106 = vmatpush.msra.mxu0 0.0
        %1107 = vmatpush.msra.mxu0 0.0
        %1108 = vmatpush.msra.mxu0 0.0
        %1109 = vmatpush.msra.mxu0 0.0
        %1110 = vmatpush.msra.mxu0 0.0
        %1111 = vmatpush.msra.mxu0 0.0
        %1112 = vmatpush.msra.mxu0 0.0
        %1113 = vmatpush.msra.mxu0 0.0
        %1114 = vmatpush.msra.mxu0 0.0
        %1115 = vmatpush.msra.mxu0 0.0
        %1116 = vmatpush.msra.mxu0 %v1094
        %1117 = vmatmul.f32.gmra.mxu0 %v1099
        %v1118 = vpop.f32.mrf.mxu0
        %v1119 = vadd.f32 0.0, %v1118
        %1120 = vdwg.mxu0
        %1121 = vmatpush.msra.mxu0 0.0
        %1122 = vmatpush.msra.mxu0 0.0
        %1123 = vmatpush.msra.mxu0 0.0
        %1124 = vmatpush.msra.mxu0 0.0
        %1125 = vmatpush.msra.mxu0 0.0
        %1126 = vmatpush.msra.mxu0 0.0
        %1127 = vmatpush.msra.mxu0 0.0
        %1128 = vmatpush.msra.mxu0 0.0
        %1129 = vmatpush.msra.mxu0 0.0
        %1130 = vmatpush.msra.mxu0 0.0
        %1131 = vmatpush.msra.mxu0 0.0
        %1132 = vmatpush.msra.mxu0 0.0
        %1133 = vmatpush.msra.mxu0 0.0
        %1134 = vmatpush.msra.mxu0 0.0
        %1135 = vmatpush.msra.mxu0 0.0
        %1136 = vmatpush.msra.mxu0 %v1095
        %1137 = vmatmul.f32.gmra.mxu0 %v1099
        %v1138 = vpop.f32.mrf.mxu0
        %v1139 = vadd.f32 0.0, %v1138
        %1140 = vdwg.mxu0
        %v1141 = vadd.f32 %v1078, %v1119
        %v1142 = vadd.f32 %v1079, %v1139
        %1143 = vrot.lane.b32.xlu0 %v467, 30
        %v1144 = vpop.permute.xlu0 %1143
        %1145 = vrot.lane.b32.xlu0 %v468, 30
        %v1146 = vpop.permute.xlu0 %1145
        %vm1147 = vcmp.lt.s32.totalorder %v474, 30
        %v1148 = vsel %vm1147, %v1144, %v1146
        %v1149 = vsel %vm1147, %v1146, %v1144
        %s1150 = scalar_lea.vmem %s6, 22
        %v1151 = vld [vmem:[%s1150] sm:$0x3]
        %v1153 = vperm.slane %v1151, 0
        %v1154 = vperm.slane %v1151, 1
        %v1157 = vmul.f32 %v1149, %v1153
        %v1158 = vmul.f32 %v1148, %v1154
        %s1159 = scalar_lea.vmem %s5, 88
        %v1160 = vld [vmem:[%s1159] sm:$0xff]
        %v1162 = vsel %vm505, %v1160, 0
        %1164 = vmatpush.msra.mxu0 0.0
        %1165 = vmatpush.msra.mxu0 0.0
        %1166 = vmatpush.msra.mxu0 0.0
        %1167 = vmatpush.msra.mxu0 0.0
        %1168 = vmatpush.msra.mxu0 0.0
        %1169 = vmatpush.msra.mxu0 0.0
        %1170 = vmatpush.msra.mxu0 0.0
        %1171 = vmatpush.msra.mxu0 0.0
        %1172 = vmatpush.msra.mxu0 0.0
        %1173 = vmatpush.msra.mxu0 0.0
        %1174 = vmatpush.msra.mxu0 0.0
        %1175 = vmatpush.msra.mxu0 0.0
        %1176 = vmatpush.msra.mxu0 0.0
        %1177 = vmatpush.msra.mxu0 0.0
        %1178 = vmatpush.msra.mxu0 0.0
        %1179 = vmatpush.msra.mxu0 %v1157
        %1180 = vmatmul.f32.gmra.mxu0 %v1162
        %v1181 = vpop.f32.mrf.mxu0
        %v1182 = vadd.f32 0.0, %v1181
        %1183 = vdwg.mxu0
        %1184 = vmatpush.msra.mxu0 0.0
        %1185 = vmatpush.msra.mxu0 0.0
        %1186 = vmatpush.msra.mxu0 0.0
        %1187 = vmatpush.msra.mxu0 0.0
        %1188 = vmatpush.msra.mxu0 0.0
        %1189 = vmatpush.msra.mxu0 0.0
        %1190 = vmatpush.msra.mxu0 0.0
        %1191 = vmatpush.msra.mxu0 0.0
        %1192 = vmatpush.msra.mxu0 0.0
        %1193 = vmatpush.msra.mxu0 0.0
        %1194 = vmatpush.msra.mxu0 0.0
        %1195 = vmatpush.msra.mxu0 0.0
        %1196 = vmatpush.msra.mxu0 0.0
        %1197 = vmatpush.msra.mxu0 0.0
        %1198 = vmatpush.msra.mxu0 0.0
        %1199 = vmatpush.msra.mxu0 %v1158
        %1200 = vmatmul.f32.gmra.mxu0 %v1162
        %v1201 = vpop.f32.mrf.mxu0
        %v1202 = vadd.f32 0.0, %v1201
        %1203 = vdwg.mxu0
        %v1204 = vadd.f32 %v1141, %v1182
        %v1205 = vadd.f32 %v1142, %v1202
        %1206 = vrot.lane.b32.xlu0 %v467, 2
        %v1207 = vpop.permute.xlu0 %1206
        %1208 = vrot.lane.b32.xlu0 %v468, 2
        %v1209 = vpop.permute.xlu0 %1208
        %vm1210 = vcmp.lt.s32.totalorder %v474, 2
        %v1211 = vsel %vm1210, %v1207, %v1209
        %v1212 = vsel %vm1210, %v1209, %v1207
        %s1213 = scalar_lea.vmem %s6, 24
        %v1214 = vld [vmem:[%s1213] sm:$0x3]
        %v1216 = vperm.slane %v1214, 0
        %v1217 = vperm.slane %v1214, 1
        %v1220 = vmul.f32 %v1212, %v1216
        %v1221 = vmul.f32 %v1211, %v1217
        %s1222 = scalar_lea.vmem %s5, 96
        %v1223 = vld [vmem:[%s1222] sm:$0xff]
        %v1225 = vsel %vm505, %v1223, 0
        %1227 = vmatpush.msra.mxu0 0.0
        %1228 = vmatpush.msra.mxu0 0.0
        %1229 = vmatpush.msra.mxu0 0.0
        %1230 = vmatpush.msra.mxu0 0.0
        %1231 = vmatpush.msra.mxu0 0.0
        %1232 = vmatpush.msra.mxu0 0.0
        %1233 = vmatpush.msra.mxu0 0.0
        %1234 = vmatpush.msra.mxu0 0.0
        %1235 = vmatpush.msra.mxu0 0.0
        %1236 = vmatpush.msra.mxu0 0.0
        %1237 = vmatpush.msra.mxu0 0.0
        %1238 = vmatpush.msra.mxu0 0.0
        %1239 = vmatpush.msra.mxu0 0.0
        %1240 = vmatpush.msra.mxu0 0.0
        %1241 = vmatpush.msra.mxu0 0.0
        %1242 = vmatpush.msra.mxu0 %v1220
        %1243 = vmatmul.f32.gmra.mxu0 %v1225
        %v1244 = vpop.f32.mrf.mxu0
        %v1245 = vadd.f32 0.0, %v1244
        %1246 = vdwg.mxu0
        %1247 = vmatpush.msra.mxu0 0.0
        %1248 = vmatpush.msra.mxu0 0.0
        %1249 = vmatpush.msra.mxu0 0.0
        %1250 = vmatpush.msra.mxu0 0.0
        %1251 = vmatpush.msra.mxu0 0.0
        %1252 = vmatpush.msra.mxu0 0.0
        %1253 = vmatpush.msra.mxu0 0.0
        %1254 = vmatpush.msra.mxu0 0.0
        %1255 = vmatpush.msra.mxu0 0.0
        %1256 = vmatpush.msra.mxu0 0.0
        %1257 = vmatpush.msra.mxu0 0.0
        %1258 = vmatpush.msra.mxu0 0.0
        %1259 = vmatpush.msra.mxu0 0.0
        %1260 = vmatpush.msra.mxu0 0.0
        %1261 = vmatpush.msra.mxu0 0.0
        %1262 = vmatpush.msra.mxu0 %v1221
        %1263 = vmatmul.f32.gmra.mxu0 %v1225
        %v1264 = vpop.f32.mrf.mxu0
        %v1265 = vadd.f32 0.0, %v1264
        %1266 = vdwg.mxu0
        %v1267 = vadd.f32 %v1204, %v1245
        %v1268 = vadd.f32 %v1205, %v1265
        %1269 = vrot.lane.b32.xlu0 %v467, 126
        %v1270 = vpop.permute.xlu0 %1269
        %1271 = vrot.lane.b32.xlu0 %v468, 126
        %v1272 = vpop.permute.xlu0 %1271
        %vm1273 = vcmp.lt.s32.totalorder %v474, 126
        %v1274 = vsel %vm1273, %v1270, %v1272
        %v1275 = vsel %vm1273, %v1272, %v1270
        %s1276 = scalar_lea.vmem %s6, 26
        %v1277 = vld [vmem:[%s1276] sm:$0x3]
        %v1279 = vperm.slane %v1277, 0
        %v1280 = vperm.slane %v1277, 1
        %v1283 = vmul.f32 %v1274, %v1279
        %v1284 = vmul.f32 %v1275, %v1280
        %s1285 = scalar_lea.vmem %s5, 104
        %v1286 = vld [vmem:[%s1285] sm:$0xff]
        %v1288 = vsel %vm505, %v1286, 0
        %1290 = vmatpush.msra.mxu0 0.0
        %1291 = vmatpush.msra.mxu0 0.0
        %1292 = vmatpush.msra.mxu0 0.0
        %1293 = vmatpush.msra.mxu0 0.0
        %1294 = vmatpush.msra.mxu0 0.0
        %1295 = vmatpush.msra.mxu0 0.0
        %1296 = vmatpush.msra.mxu0 0.0
        %1297 = vmatpush.msra.mxu0 0.0
        %1298 = vmatpush.msra.mxu0 0.0
        %1299 = vmatpush.msra.mxu0 0.0
        %1300 = vmatpush.msra.mxu0 0.0
        %1301 = vmatpush.msra.mxu0 0.0
        %1302 = vmatpush.msra.mxu0 0.0
        %1303 = vmatpush.msra.mxu0 0.0
        %1304 = vmatpush.msra.mxu0 0.0
        %1305 = vmatpush.msra.mxu0 %v1283
        %1306 = vmatmul.f32.gmra.mxu0 %v1288
        %v1307 = vpop.f32.mrf.mxu0
        %v1308 = vadd.f32 0.0, %v1307
        %1309 = vdwg.mxu0
        %1310 = vmatpush.msra.mxu0 0.0
        %1311 = vmatpush.msra.mxu0 0.0
        %1312 = vmatpush.msra.mxu0 0.0
        %1313 = vmatpush.msra.mxu0 0.0
        %1314 = vmatpush.msra.mxu0 0.0
        %1315 = vmatpush.msra.mxu0 0.0
        %1316 = vmatpush.msra.mxu0 0.0
        %1317 = vmatpush.msra.mxu0 0.0
        %1318 = vmatpush.msra.mxu0 0.0
        %1319 = vmatpush.msra.mxu0 0.0
        %1320 = vmatpush.msra.mxu0 0.0
        %1321 = vmatpush.msra.mxu0 0.0
        %1322 = vmatpush.msra.mxu0 0.0
        %1323 = vmatpush.msra.mxu0 0.0
        %1324 = vmatpush.msra.mxu0 0.0
        %1325 = vmatpush.msra.mxu0 %v1284
        %1326 = vmatmul.f32.gmra.mxu0 %v1288
        %v1327 = vpop.f32.mrf.mxu0
        %v1328 = vadd.f32 0.0, %v1327
        %1329 = vdwg.mxu0
        %v1330 = vadd.f32 %v1267, %v1308
        %v1331 = vadd.f32 %v1268, %v1328
        %1332 = vrot.lane.b32.xlu0 %v467, 98
        %v1333 = vpop.permute.xlu0 %1332
        %1334 = vrot.lane.b32.xlu0 %v468, 98
        %v1335 = vpop.permute.xlu0 %1334
        %vm1336 = vcmp.lt.s32.totalorder %v474, 98
        %v1337 = vsel %vm1336, %v1333, %v1335
        %v1338 = vsel %vm1336, %v1335, %v1333
        %s1339 = scalar_lea.vmem %s6, 28
        %v1340 = vld [vmem:[%s1339] sm:$0x3]
        %v1342 = vperm.slane %v1340, 0
        %v1343 = vperm.slane %v1340, 1
        %v1346 = vmul.f32 %v1337, %v1342
        %v1347 = vmul.f32 %v1338, %v1343
        %s1348 = scalar_lea.vmem %s5, 112
        %v1349 = vld [vmem:[%s1348] sm:$0xff]
        %v1351 = vsel %vm505, %v1349, 0
        %1353 = vmatpush.msra.mxu0 0.0
        %1354 = vmatpush.msra.mxu0 0.0
        %1355 = vmatpush.msra.mxu0 0.0
        %1356 = vmatpush.msra.mxu0 0.0
        %1357 = vmatpush.msra.mxu0 0.0
        %1358 = vmatpush.msra.mxu0 0.0
        %1359 = vmatpush.msra.mxu0 0.0
        %1360 = vmatpush.msra.mxu0 0.0
        %1361 = vmatpush.msra.mxu0 0.0
        %1362 = vmatpush.msra.mxu0 0.0
        %1363 = vmatpush.msra.mxu0 0.0
        %1364 = vmatpush.msra.mxu0 0.0
        %1365 = vmatpush.msra.mxu0 0.0
        %1366 = vmatpush.msra.mxu0 0.0
        %1367 = vmatpush.msra.mxu0 0.0
        %1368 = vmatpush.msra.mxu0 %v1346
        %1369 = vmatmul.f32.gmra.mxu0 %v1351
        %v1370 = vpop.f32.mrf.mxu0
        %v1371 = vadd.f32 0.0, %v1370
        %1372 = vdwg.mxu0
        %1373 = vmatpush.msra.mxu0 0.0
        %1374 = vmatpush.msra.mxu0 0.0
        %1375 = vmatpush.msra.mxu0 0.0
        %1376 = vmatpush.msra.mxu0 0.0
        %1377 = vmatpush.msra.mxu0 0.0
        %1378 = vmatpush.msra.mxu0 0.0
        %1379 = vmatpush.msra.mxu0 0.0
        %1380 = vmatpush.msra.mxu0 0.0
        %1381 = vmatpush.msra.mxu0 0.0
        %1382 = vmatpush.msra.mxu0 0.0
        %1383 = vmatpush.msra.mxu0 0.0
        %1384 = vmatpush.msra.mxu0 0.0
        %1385 = vmatpush.msra.mxu0 0.0
        %1386 = vmatpush.msra.mxu0 0.0
        %1387 = vmatpush.msra.mxu0 0.0
        %1388 = vmatpush.msra.mxu0 %v1347
        %1389 = vmatmul.f32.gmra.mxu0 %v1351
        %v1390 = vpop.f32.mrf.mxu0
        %v1391 = vadd.f32 0.0, %v1390
        %1392 = vdwg.mxu0
        %v1393 = vadd.f32 %v1330, %v1371
        %v1394 = vadd.f32 %v1331, %v1391
        %1395 = vrot.lane.b32.xlu0 %v467, 96
        %v1396 = vpop.permute.xlu0 %1395
        %1397 = vrot.lane.b32.xlu0 %v468, 96
        %v1398 = vpop.permute.xlu0 %1397
        %vm1399 = vcmp.lt.s32.totalorder %v474, 96
        %v1400 = vsel %vm1399, %v1396, %v1398
        %v1401 = vsel %vm1399, %v1398, %v1396
        %s1402 = scalar_lea.vmem %s6, 30
        %v1403 = vld [vmem:[%s1402] sm:$0x3]
        %v1405 = vperm.slane %v1403, 0
        %v1406 = vperm.slane %v1403, 1
        %v1409 = vmul.f32 %v1400, %v1405
        %v1410 = vmul.f32 %v1401, %v1406
        %s1411 = scalar_lea.vmem %s5, 120
        %v1412 = vld [vmem:[%s1411] sm:$0xff]
        %v1414 = vsel %vm505, %v1412, 0
        %1416 = vmatpush.msra.mxu0 0.0
        %1417 = vmatpush.msra.mxu0 0.0
        %1418 = vmatpush.msra.mxu0 0.0
        %1419 = vmatpush.msra.mxu0 0.0
        %1420 = vmatpush.msra.mxu0 0.0
        %1421 = vmatpush.msra.mxu0 0.0
        %1422 = vmatpush.msra.mxu0 0.0
        %1423 = vmatpush.msra.mxu0 0.0
        %1424 = vmatpush.msra.mxu0 0.0
        %1425 = vmatpush.msra.mxu0 0.0
        %1426 = vmatpush.msra.mxu0 0.0
        %1427 = vmatpush.msra.mxu0 0.0
        %1428 = vmatpush.msra.mxu0 0.0
        %1429 = vmatpush.msra.mxu0 0.0
        %1430 = vmatpush.msra.mxu0 0.0
        %1431 = vmatpush.msra.mxu0 %v1409
        %1432 = vmatmul.f32.gmra.mxu0 %v1414
        %v1433 = vpop.f32.mrf.mxu0
        %v1434 = vadd.f32 0.0, %v1433
        %1435 = vdwg.mxu0
        %1436 = vmatpush.msra.mxu0 0.0
        %1437 = vmatpush.msra.mxu0 0.0
        %1438 = vmatpush.msra.mxu0 0.0
        %1439 = vmatpush.msra.mxu0 0.0
        %1440 = vmatpush.msra.mxu0 0.0
        %1441 = vmatpush.msra.mxu0 0.0
        %1442 = vmatpush.msra.mxu0 0.0
        %1443 = vmatpush.msra.mxu0 0.0
        %1444 = vmatpush.msra.mxu0 0.0
        %1445 = vmatpush.msra.mxu0 0.0
        %1446 = vmatpush.msra.mxu0 0.0
        %1447 = vmatpush.msra.mxu0 0.0
        %1448 = vmatpush.msra.mxu0 0.0
        %1449 = vmatpush.msra.mxu0 0.0
        %1450 = vmatpush.msra.mxu0 0.0
        %1451 = vmatpush.msra.mxu0 %v1410
        %1452 = vmatmul.f32.gmra.mxu0 %v1414
        %v1453 = vpop.f32.mrf.mxu0
        %v1454 = vadd.f32 0.0, %v1453
        %1455 = vdwg.mxu0
        %v1456 = vadd.f32 %v1393, %v1434
        %v1457 = vadd.f32 %v1394, %v1454
        %1458 = vrot.lane.b32.xlu0 %v467, 94
        %v1459 = vpop.permute.xlu0 %1458
        %1460 = vrot.lane.b32.xlu0 %v468, 94
        %v1461 = vpop.permute.xlu0 %1460
        %vm1462 = vcmp.lt.s32.totalorder %v474, 94
        %v1463 = vsel %vm1462, %v1459, %v1461
        %v1464 = vsel %vm1462, %v1461, %v1459
        %s1465 = scalar_lea.vmem %s6, 32
        %v1466 = vld [vmem:[%s1465] sm:$0x3]
        %v1468 = vperm.slane %v1466, 0
        %v1469 = vperm.slane %v1466, 1
        %v1472 = vmul.f32 %v1463, %v1468
        %v1473 = vmul.f32 %v1464, %v1469
        %s1474 = scalar_lea.vmem %s5, 128
        %v1475 = vld [vmem:[%s1474] sm:$0xff]
        %v1477 = vsel %vm505, %v1475, 0
        %1479 = vmatpush.msra.mxu0 0.0
        %1480 = vmatpush.msra.mxu0 0.0
        %1481 = vmatpush.msra.mxu0 0.0
        %1482 = vmatpush.msra.mxu0 0.0
        %1483 = vmatpush.msra.mxu0 0.0
        %1484 = vmatpush.msra.mxu0 0.0
        %1485 = vmatpush.msra.mxu0 0.0
        %1486 = vmatpush.msra.mxu0 0.0
        %1487 = vmatpush.msra.mxu0 0.0
        %1488 = vmatpush.msra.mxu0 0.0
        %1489 = vmatpush.msra.mxu0 0.0
        %1490 = vmatpush.msra.mxu0 0.0
        %1491 = vmatpush.msra.mxu0 0.0
        %1492 = vmatpush.msra.mxu0 0.0
        %1493 = vmatpush.msra.mxu0 0.0
        %1494 = vmatpush.msra.mxu0 %v1472
        %1495 = vmatmul.f32.gmra.mxu0 %v1477
        %v1496 = vpop.f32.mrf.mxu0
        %v1497 = vadd.f32 0.0, %v1496
        %1498 = vdwg.mxu0
        %1499 = vmatpush.msra.mxu0 0.0
        %1500 = vmatpush.msra.mxu0 0.0
        %1501 = vmatpush.msra.mxu0 0.0
        %1502 = vmatpush.msra.mxu0 0.0
        %1503 = vmatpush.msra.mxu0 0.0
        %1504 = vmatpush.msra.mxu0 0.0
        %1505 = vmatpush.msra.mxu0 0.0
        %1506 = vmatpush.msra.mxu0 0.0
        %1507 = vmatpush.msra.mxu0 0.0
        %1508 = vmatpush.msra.mxu0 0.0
        %1509 = vmatpush.msra.mxu0 0.0
        %1510 = vmatpush.msra.mxu0 0.0
        %1511 = vmatpush.msra.mxu0 0.0
        %1512 = vmatpush.msra.mxu0 0.0
        %1513 = vmatpush.msra.mxu0 0.0
        %1514 = vmatpush.msra.mxu0 %v1473
        %1515 = vmatmul.f32.gmra.mxu0 %v1477
        %v1516 = vpop.f32.mrf.mxu0
        %v1517 = vadd.f32 0.0, %v1516
        %1518 = vdwg.mxu0
        %v1519 = vadd.f32 %v1456, %v1497
        %v1520 = vadd.f32 %v1457, %v1517
        %v1521 = vld [vmem:[%s7] sm:$0xff]
        %1523 = vset.pattern.permute.xlu0 0
        %1524 = vperm.xlu0 %1523, %v1521
        %v1525 = vpop.permute.xlu0 %1524
        %v1527 = vadd.f32 %v1519, %v1525
        %v1528 = vadd.f32 %v1520, %v1525
        %v1529 = vld [vmem:[%s8] sm:$0xff]
        %v1531 = vsel %vm505, %v1529, 0
        %1533 = vmatpush.msra.mxu0 0.0
        %1534 = vmatpush.msra.mxu0 0.0
        %1535 = vmatpush.msra.mxu0 0.0
        %1536 = vmatpush.msra.mxu0 0.0
        %1537 = vmatpush.msra.mxu0 0.0
        %1538 = vmatpush.msra.mxu0 0.0
        %1539 = vmatpush.msra.mxu0 0.0
        %1540 = vmatpush.msra.mxu0 0.0
        %1541 = vmatpush.msra.mxu0 0.0
        %1542 = vmatpush.msra.mxu0 0.0
        %1543 = vmatpush.msra.mxu0 0.0
        %1544 = vmatpush.msra.mxu0 0.0
        %1545 = vmatpush.msra.mxu0 0.0
        %1546 = vmatpush.msra.mxu0 0.0
        %1547 = vmatpush.msra.mxu0 0.0
        %1548 = vmatpush.msra.mxu0 %v1527
        %1549 = vmatmul.f32.gmra.mxu0 %v1531
        %v1550 = vpop.f32.mrf.mxu0
        %v1551 = vadd.f32 0.0, %v1550
        %1552 = vdwg.mxu0
        %1553 = vmatpush.msra.mxu0 0.0
        %1554 = vmatpush.msra.mxu0 0.0
        %1555 = vmatpush.msra.mxu0 0.0
        %1556 = vmatpush.msra.mxu0 0.0
        %1557 = vmatpush.msra.mxu0 0.0
        %1558 = vmatpush.msra.mxu0 0.0
        %1559 = vmatpush.msra.mxu0 0.0
        %1560 = vmatpush.msra.mxu0 0.0
        %1561 = vmatpush.msra.mxu0 0.0
        %1562 = vmatpush.msra.mxu0 0.0
        %1563 = vmatpush.msra.mxu0 0.0
        %1564 = vmatpush.msra.mxu0 0.0
        %1565 = vmatpush.msra.mxu0 0.0
        %1566 = vmatpush.msra.mxu0 0.0
        %1567 = vmatpush.msra.mxu0 0.0
        %1568 = vmatpush.msra.mxu0 %v1528
        %1569 = vmatmul.f32.gmra.mxu0 %v1531
        %v1570 = vpop.f32.mrf.mxu0
        %v1571 = vadd.f32 0.0, %v1570
        %1572 = vdwg.mxu0
        %v1573 = vadd.f32 %v1551, %v1571
        %1574 = vadd.xlane.f32.xlu0 %v1573
        %v1575 = vpop.xlane.xlu0 %1574
        %v1576 = vmul.f32 %v1575, 0.00390625
        %v1577 = vrot.slane %v1576, 4
        %v1578 = vmax.f32 %v1576, %v1577
        %v1579 = vrot.slane %v1578, 2
        %v1580 = vmax.f32 %v1578, %v1579
        %v1581 = vrot.slane %v1580, 1
        %v1582 = vmax.f32 %v1580, %v1581
        %v1583 = vsub.f32 %v1576, %v1582
        %v1584 = vmul.f32 %v1583, 1.442695
        %v1585 = vpow.pop %v1584
        %v1586 = vrot.slane %v1585, 4
        %v1587 = vadd.f32 %v1585, %v1586
        %v1588 = vrot.slane %v1587, 2
        %v1589 = vadd.f32 %v1587, %v1588
        %v1590 = vrot.slane %v1589, 1
        %v1591 = vadd.f32 %v1589, %v1590
        %v1592 = vrcp.pop %v1591
        %v1593 = vmul.f32 %v1591, %v1592
        %v1594 = vsub.f32 1.0, %v1593
        %v1595 = vmul.f32 %v1592, %v1594
        %v1596 = vadd.f32 %v1592, %v1595
        %vm1597 = vweird.f32 %v1591
        %vm1598 = vweird.f32 %v1592
        %vm1599 = vmor %vm1597, %vm1598
        %v1600 = vsel %vm1599, %v1592, %v1596
        %v1601 = vand.u32 2147483647, %v1591
        %vm1602 = vcmp.eq.f32.partialorder %v1601, 8.507059e+37
        %v1603 = vand.u32 %v1591, 2147483648
        %v1604 = vor.u32 1.1754944e-38, %v1603
        %v1605 = vsel %vm1602, %v1604, %v1600
        %v1606 = vmul.f32 %v1585, %v1605
        %v1607 = vmul.f32 %v1606, %v1527
        %v1608 = vmul.f32 %v1606, %v1528
        %1609 = vst [vmem:[%s340] sm:$0xff] %v1607
        %1610 = vst [vmem:[%s340 + $0x8] sm:$0xff] %v1608
        %s1611 = sand.u32 %s230, 1
        %s1612 = scalar_lea.sflag [#allocation3], %s1611
        %s1613 = sand.u32 %s230, 1
        %s1614 = smul.addr %s1613, 16
        %s1615 = scalar_lea.vmem [#allocation2], %s1614
        // Predicated region
        $region57: #{tpu_custom_call.1} parent=55 // pred_check
          %p1616 = pneg %p240
        $region58: #{tpu_custom_call.1} parent=55 // pred_check_branch
          %1618 = sbr.rel (%p1616) target = $region60
        $region59: #{tpu_custom_call.1} parent=55 // pred_region
          %1620 = vsyncadd %s1612, 0
          %s1621 = smul.addr %s23, 2
          %s1622 = smul.addr %s1621, 8
          %s1623 = scalar_lea.hbm %s9, %s1622
          %s1625 = sshll.u32 %s1615, 4
          %s1626 = int_to_ptr.vmem [resolvable:$true] %s1625
          %s1627 = sshll.u32 %s1623, 4
          %s1628 = int_to_ptr.hbm [resolvable:$true] %s1627
          %1630 = dma.vmem_to_hbm [thread:$0]  %s1626, 256, %s1628, %s1612
        $region60: #{tpu_custom_call.1} parent=55 // pred_fallthru
          _
      $region56: #{tpu_custom_call.1} parent=5 // pred_fallthru
        _
      %p1631 = scmp.le.s32.totalorder 2, %s18
      // Predicated region
      $region61: #{tpu_custom_call.1} parent=5 // pred_check
        %p1632 = pneg %p1631
      $region62: #{tpu_custom_call.1} parent=5 // pred_check_branch
        %1634 = sbr.rel (%p1632) target = $region64
      $region63: #{tpu_custom_call.1} parent=5 // pred_region
        %s1635 = ssub.s32 %s18, 2
        // Predicated region
        $region65: #{tpu_custom_call.1} parent=63 // pred_check
          %p1636 = pneg %p246
        $region66: #{tpu_custom_call.1} parent=63 // pred_check_branch
          %1638 = sbr.rel (%p1636) target = $region68
        $region67: #{tpu_custom_call.1} parent=63 // pred_region
          %s1639 = sand.u32 %s231, 1
          %s1640 = scalar_lea.sflag [#allocation3], %s1639
          %s1641 = sand.u32 %s231, 1
          %s1642 = smul.addr %s1641, 16
          %s1643 = scalar_lea.vmem [#allocation2], %s1642
          %1645 = dma.done %s1640, 256
        $region68: #{tpu_custom_call.1} parent=63 // pred_fallthru
          _
      $region64: #{tpu_custom_call.1} parent=5 // pred_fallthru
        _
    $region6: #{tpu_custom_call.1} parent=1 // loop_footer
      %s22 = sadd.s32 1, %s18
    $region7: #{tpu_custom_call.1} parent=1 // loop_footer_branch
      %17 = sbr.rel target = $region3
    $region8: #{tpu_custom_call.1} parent=1 // loop_exit
      _
    %1646 = vsyncpa [#allocation3], 1
    %s1647 = scalar_lea.sflag [#allocation3], 1
    %1648 = vsyncpa %s1647, 1

</llo_original>
